<compile_context>
chip_gen: v7x
topology: tpu7x:2x2x1
jax: 0.10.0
libtpu: 0.0.40
codegen_flags: <defaults>
</compile_context>

<pallas_src>
import jax
import jax.numpy as jnp
from jax import lax
from jax.experimental import pallas as pl
from jax.experimental.pallas import tpu as pltpu

EMBED = 32
HEADS = 8
HEAD_DIM = EMBED // HEADS
FWD_EXP = 4
HIDDEN = FWD_EXP * EMBED
EPS = 1e-5                    # PyTorch LayerNorm default eps
SCALE = EMBED ** 0.5          # energy / sqrt(embed_size)
INV_SCALE = 1.0 / SCALE


# ----------------------------- in-kernel helpers -----------------------------

def _layernorm(v, gamma, beta):
    mean = jnp.mean(v, axis=-1, keepdims=True)
    c = v - mean
    var = jnp.mean(c * c, axis=-1, keepdims=True)
    return c * lax.rsqrt(var + EPS) * gamma + beta


# --------------------------------- kernel ------------------------------------

def decoder_block_kernel(
    x_ref,                    # (1, S, E)    f32  decoder input (q=k=v of self-attn)
    val_ref,                  # (1, Skv, E)  f32  cross-attn KEYS source (`value` arg)
    key_ref,                  # (1, Skv, E)  f32  cross-attn VALUES source (`key` arg)
    trg_mask_ref,             # (1, S, S)    f32  un-replicated mask (0 => masked)
    src_mask_ref,             # (1, S, Skv)  f32
    wn_ref,                   # (2E+HIDDEN, E) bf16  [w_sa; w_ca; w_ff2] slab
    wff1_ref,                 # (E, HIDDEN)  bf16
    vec_ref,                  # (10, HIDDEN) f32  bias / LayerNorm vector slab
    out_ref,                  # (1, S, E)    f32
):
    f32 = jnp.float32
    bf16 = jnp.bfloat16

    # -------- per-batch inputs (grid axis = batch) --------
    x = x_ref[0]                                   # (S, E)
    ca_keys = val_ref[0]                           # (Skv, E)  keys   <- `value` input
    ca_vals = key_ref[0]                           # (Skv, E)  values <- `key` input
    trg_mask = trg_mask_ref[0]                     # (S, S)
    src_mask = src_mask_ref[0]                     # (S, Skv)

    # -------- packed parameters --------
    w_sa = wn_ref[0:EMBED, :]                      # (E, E)       bf16
    w_ca = wn_ref[EMBED:2 * EMBED, :]              # (E, E)
    w_ff2 = wn_ref[2 * EMBED:2 * EMBED + HIDDEN, :]  # (HIDDEN, E)
    w_ff1 = wff1_ref[...]                          # (E, HIDDEN)  bf16
    vec = vec_ref[...]                             # (10, HIDDEN) f32
    b_sa = vec[0:1, :EMBED]
    g_n = vec[1:2, :EMBED]
    b_n = vec[2:3, :EMBED]
    b_ca = vec[3:4, :EMBED]
    g_n1 = vec[4:5, :EMBED]
    b_n1 = vec[5:6, :EMBED]
    b_ff2 = vec[6:7, :EMBED]
    g_n2 = vec[7:8, :EMBED]
    b_n2 = vec[8:9, :EMBED]
    b_ff1 = vec[9:10, :]                           # (1, HIDDEN)

    # head-select matrix (H, E): hsel[h, e] = 1 iff column e belongs to head h.
    # Built from iota in-kernel -> no HBM traffic for head expansion.
    col = lax.broadcasted_iota(jnp.int32, (HEADS, EMBED), 1)
    head = lax.broadcasted_iota(jnp.int32, (HEADS, EMBED), 0)
    hsel = jnp.logical_and(col >= head * HEAD_DIM,
                           col < (head + 1) * HEAD_DIM).astype(f32)
    hsel_b = hsel.astype(bf16)

    def mha(q, k, v, mask, w_fc, b_fc):
        """Multi-head attention, all heads packed along the sublane axis.

        q:    (Sq, E)  f32   (full embed layout)
        k, v: (Sk, E)  f32   (un-expanded; bf16-cast for the MXU)
        mask: (Sq, Sk) f32   (0 => masked; broadcast over heads in-kernel)
        w_fc: (E, E)   bf16 stored (in, out); b_fc: (1, E) f32
        returns (Sq, E) f32
        """
        sq, sk = q.shape[0], k.shape[0]
        # fold 1/sqrt(E) into q once; head-expand the QUERY along a leading axis
        # (heads land on sublanes -> one 2-D matmul per attention, no per-head
        # lane slicing, no 16-deep batched einsums).
        qb = (q * INV_SCALE).astype(bf16)
        q_exp = (qb[None, :, :] * hsel_b[:, None, :]).reshape(HEADS * sq, EMBED)

        # single MXU matmul for all heads: (H*Sq, E) x (Sk, E)^T -> (H*Sq, Sk)
        energy = jnp.einsum("qe,ke->qk", q_exp, k.astype(bf16),
                            preferred_element_type=f32)

        # un-replicated mask, broadcast over the head axis here (8x less HBM /
        # VMEM than shipping a replicated mask).  mask == 0 => -1e20, matching
        # masked_fill; exact 0/1 float masks only.  Masking the *unscaled*
        # energy is equivalent to the reference (exp underflows to 0 either way).
        mask_rep = jnp.broadcast_to(mask[None], (HEADS, sq, sk)).reshape(
            HEADS * sq, sk)
        energy = jnp.where(mask_rep == 0.0, jnp.float32(-1e20), energy)

        # per-(head, row) softmax in f32 over the lane axis (no reshape needed).
        m = jnp.max(energy, axis=-1, keepdims=True)
        p = jnp.exp(energy - m)
        denom = jnp.sum(p, axis=-1, keepdims=True)
        # guard fully-masked rows before the approximate (EUP) reciprocal.
        p = p * pl.reciprocal(jnp.maximum(denom, jnp.float32(1e-30)), approx=True)

        # context for every (head, row): one MXU matmul (H*Sq, Sk) x (Sk, E).
        ctx = jnp.dot(p.astype(bf16), v.astype(bf16),
                      preferred_element_type=f32)              # (H*Sq, E)

        # head-concat: column e keeps only its own head's block; tree reduction
        # over the leading head axis instead of a serial 7-add chain.
        o = (ctx.reshape(HEADS, sq, EMBED) * hsel[:, None, :]).sum(axis=0)

        return jnp.dot(o.astype(bf16), w_fc,
                       preferred_element_type=f32) + b_fc

    # ---- DecoderBlock self-attention: q = k = v = x (dedup'd), mask = trg ----
    att1 = mha(x, x, x, trg_mask, w_sa, b_sa)
    # dropout == identity (deterministic forward)
    query = _layernorm(att1 + x, g_n, b_n)

    # ---- TransformerBlock cross-attention (argument shuffle reproduced):
    # keys <- decoder `value` input, values <- decoder `key` input, mask = src
    att2 = mha(query, ca_keys, ca_vals, src_mask, w_ca, b_ca)
    h = _layernorm(att2 + query, g_n1, b_n1)
    h = _layernorm(h, g_n1, b_n1)                 # norm1 applied twice

    # ---- feed-forward: bf16 MXU operands, f32 accumulate / elementwise ----
    ff = jnp.dot(h.astype(jnp.bfloat16), w_ff1,
                 preferred_element_type=f32) + b_ff1
    ff = jnp.maximum(ff, 0.0)
    ff = jnp.dot(ff.astype(jnp.bfloat16), w_ff2,
                 preferred_element_type=f32) + b_ff2

    out = _layernorm(ff + h, g_n2, b_n2)
    out_ref[0] = out.astype(out_ref.dtype)


# -------------------------------- wrapper ------------------------------------

def decoder_block(x, value, key, src_mask, trg_mask, params):
    N, S, E = x.shape
    assert E == EMBED
    Skv = value.shape[1]
    f32, bf16 = jnp.float32, jnp.bfloat16

    # ---- pack the 14 small parameter tensors into 3 slabs (fewer DMAs) ----
    w_slab = jnp.concatenate(
        [params["w_sa"].astype(bf16), params["w_ca"].astype(bf16),
         params["w_ff2"].astype(bf16)], axis=0)                  # (2E+HIDDEN, E)
    w_ff1 = params["w_ff1"].astype(bf16)                         # (E, HIDDEN)

    def pad_e(v):
        return jnp.pad(v, ((0, 0), (0, HIDDEN - EMBED)))

    vec_slab = jnp.concatenate(
        [pad_e(params["b_sa"]), pad_e(params["g_n"]), pad_e(params["b_n"]),
         pad_e(params["b_ca"]), pad_e(params["g_n1"]), pad_e(params["b_n1"]),
         pad_e(params["b_ff2"]), pad_e(params["g_n2"]), pad_e(params["b_n2"]),
         params["b_ff1"]], axis=0).astype(f32)                   # (10, HIDDEN)

    inputs = [x.astype(f32), value.astype(f32), key.astype(f32),
              trg_mask.astype(f32), src_mask.astype(f32),
              w_slab, w_ff1, vec_slab]

    def batch_spec(shape):                 # per-batch block, indexed by grid n
        return pl.BlockSpec((1,) + shape, lambda n: (n, 0, 0))

    def const_spec(shape):                 # parameter slab: same block every step
        return pl.BlockSpec(shape, lambda n: (0, 0))

    in_specs = [
        batch_spec((S, E)), batch_spec((Skv, E)), batch_spec((Skv, E)),
        batch_spec((S, S)), batch_spec((S, Skv)),
        const_spec((2 * EMBED + HIDDEN, EMBED)),
        const_spec((EMBED, HIDDEN)),
        const_spec((10, HIDDEN)),
    ]
    out_specs = pl.BlockSpec((1, S, E), lambda n: (n, 0, 0))

    out = pl.pallas_call(
        decoder_block_kernel,
        out_shape=jax.ShapeDtypeStruct((N, S, E), f32),
        grid_spec=pltpu.PrefetchScalarGridSpec(
            num_scalar_prefetch=0,
            grid=(N,),                      # batch-parallel (uses both v7x TCs)
            in_specs=in_specs,
            out_specs=out_specs,
        ),
        compiler_params=pltpu.CompilerParams(
            dimension_semantics=("parallel",)),
    )(*inputs)
    return out


# ----------------------------- pure-JAX reference (f32) ----------------------

def _ln_ref(v, g, b):
    mean = jnp.mean(v, axis=-1, keepdims=True)
    var = jnp.mean((v - mean) ** 2, axis=-1, keepdims=True)
    return (v - mean) / jnp.sqrt(var + EPS) * g + b


def _attn_ref(values, keys, query, mask, w_fc, b_fc):
    N, Sq, E = query.shape
    Sk = keys.shape[1]
    Sv = values.shape[1]
    qh = query.reshape(N, Sq, HEADS, HEAD_DIM)
    kh = keys.reshape(N, Sk, HEADS, HEAD_DIM)
    vh = values.reshape(N, Sv, HEADS, HEAD_DIM)
    energy = jnp.einsum("nqhd,nkhd->nhqk", qh, kh)
    energy = jnp.where(mask[:, None, :, :] == 0, -1e20, energy)
    a = jax.nn.softmax(energy / SCALE, axis=3)
    o = jnp.einsum("nhql,nlhd->nqhd", a, vh).reshape(N, Sq, E)
    return o @ w_fc + b_fc


def decoder_block_ref(x, value, key, src_mask, trg_mask, p):
    att1 = _attn_ref(x, x, x, trg_mask, p["w_sa"], p["b_sa"])
    query = _ln_ref(att1 + x, p["g_n"], p["b_n"])
    # cross-attention: values = decoder key, keys = decoder value (arg shuffle)
    att2 = _attn_ref(key, value, query, src_mask, p["w_ca"], p["b_ca"])
    h = _ln_ref(_ln_ref(att2 + query, p["g_n1"], p["b_n1"]), p["g_n1"], p["b_n1"])
    ff = jnp.maximum(h @ p["w_ff1"] + p["b_ff1"], 0.0) @ p["w_ff2"] + p["b_ff2"]
    return _ln_ref(ff + h, p["g_n2"], p["b_n2"])


# ---------------------------------- main -------------------------------------

if __name__ == "__main__":
    N, S, SKV = 2, 8, 8
    key0 = jax.random.PRNGKey(0)
    keys = jax.random.split(key0, 12)

    x = jax.random.normal(keys[0], (N, S, EMBED), jnp.float32)
    value = jax.random.normal(keys[1], (N, SKV, EMBED), jnp.float32)
    key_in = jax.random.normal(keys[2], (N, SKV, EMBED), jnp.float32)

    # masks: float 0/1; 0 => masked (matches masked_fill(mask == 0, -1e20))
    trg_mask = jnp.broadcast_to(
        jnp.tril(jnp.ones((S, S), jnp.float32)), (N, S, S))
    src_mask = jnp.ones((N, S, SKV), jnp.float32)
    src_mask = src_mask.at[1, :, SKV - 1].set(0.0)   # exercise the src-mask path

    # Linear weights stored as (in, out) = W.T of PyTorch; biases / LN params (1, E).
    def w_init(k, shape, scale=0.08):
        return (scale * jax.random.normal(k, shape)).astype(jnp.float32)

    params = {
        "w_sa": w_init(keys[3], (EMBED, EMBED)),
        "b_sa": w_init(keys[4], (1, EMBED)),
        "g_n": jnp.ones((1, EMBED), jnp.float32),
        "b_n": jnp.zeros((1, EMBED), jnp.float32),
        "w_ca": w_init(keys[5], (EMBED, EMBED)),
        "b_ca": w_init(keys[6], (1, EMBED)),
        "g_n1": jnp.ones((1, EMBED), jnp.float32),
        "b_n1": jnp.zeros((1, EMBED), jnp.float32),
        "w_ff1": w_init(keys[7], (EMBED, HIDDEN)),
        "b_ff1": w_init(keys[8], (1, HIDDEN)),
        "w_ff2": w_init(keys[9], (HIDDEN, EMBED)),
        "b_ff2": w_init(keys[10], (1, EMBED)),
        "g_n2": jnp.ones((1, EMBED), jnp.float32),
        "b_n2": jnp.zeros((1, EMBED), jnp.float32),
    }

    out = decoder_block(x, value, key_in, src_mask, trg_mask, params)
    out = jax.block_until_ready(out)

    ref = decoder_block_ref(x, value, key_in, src_mask, trg_mask, params)
    ref = jax.block_until_ready(ref)

    assert out.shape == (N, S, EMBED)
    assert jnp.all(jnp.isfinite(out))
    # bf16 MXU operands + approx reciprocal vs. pure-f32 reference: 3e-2 tolerance.
    err = jnp.max(jnp.abs(out - ref))
    assert jnp.allclose(out, ref, rtol=3e-2, atol=3e-2), f"max abs err {err}"

    print("KERNEL_OK")
</pallas_src>

<mosaic_0001>
module attributes {stable_mosaic.version = 11 : i64} {
  func.func @decoder_block_kernel(%arg0: i32, %arg1: memref<1x8x32xf32, #tpu.memory_space<vmem>>, %arg2: memref<1x8x32xf32, #tpu.memory_space<vmem>>, %arg3: memref<1x8x32xf32, #tpu.memory_space<vmem>>, %arg4: memref<1x8x8xf32, #tpu.memory_space<vmem>>, %arg5: memref<1x8x8xf32, #tpu.memory_space<vmem>>, %arg6: memref<192x32xbf16, #tpu.memory_space<vmem>>, %arg7: memref<32x128xbf16, #tpu.memory_space<vmem>>, %arg8: memref<10x128xf32, #tpu.memory_space<vmem>>, %arg9: memref<1x8x32xf32, #tpu.memory_space<vmem>>) attributes {dimension_semantics = [#tpu.dimension_semantics<parallel>], iteration_bounds = array<i64: 2>, scalar_prefetch = 0 : i64, scratch_operands = 0 : i64, tpu.core_type = #tpu.core_type<tc>, window_params = [{transform_indices = @transform_0, window_bounds = array<i64: 1, 8, 32>}, {transform_indices = @transform_1, window_bounds = array<i64: 1, 8, 32>}, {transform_indices = @transform_2, window_bounds = array<i64: 1, 8, 32>}, {transform_indices = @transform_3, window_bounds = array<i64: 1, 8, 8>}, {transform_indices = @transform_4, window_bounds = array<i64: 1, 8, 8>}, {pipeline_mode = #tpu.pipeline_mode<synchronous>, transform_indices = @transform_5, window_bounds = array<i64: 192, 32>}, {pipeline_mode = #tpu.pipeline_mode<synchronous>, transform_indices = @transform_6, window_bounds = array<i64: 32, 128>}, {pipeline_mode = #tpu.pipeline_mode<synchronous>, transform_indices = @transform_7, window_bounds = array<i64: 10, 128>}, {transform_indices = @transform_8, window_bounds = array<i64: 1, 8, 32>}]} {
    %c0 = arith.constant 0 : index
    %c0_0 = arith.constant 0 : index
    %c0_1 = arith.constant 0 : index
    %0 = vector.load %arg1[%c0, %c0_0, %c0_1] : memref<1x8x32xf32, #tpu.memory_space<vmem>>, vector<1x8x32xf32>
    %1 = vector.shape_cast %0 : vector<1x8x32xf32> to vector<8x32xf32>
    %c0_2 = arith.constant 0 : index
    %c0_3 = arith.constant 0 : index
    %c0_4 = arith.constant 0 : index
    %2 = vector.load %arg2[%c0_2, %c0_3, %c0_4] : memref<1x8x32xf32, #tpu.memory_space<vmem>>, vector<1x8x32xf32>
    %3 = vector.shape_cast %2 : vector<1x8x32xf32> to vector<8x32xf32>
    %c0_5 = arith.constant 0 : index
    %c0_6 = arith.constant 0 : index
    %c0_7 = arith.constant 0 : index
    %4 = vector.load %arg3[%c0_5, %c0_6, %c0_7] : memref<1x8x32xf32, #tpu.memory_space<vmem>>, vector<1x8x32xf32>
    %5 = vector.shape_cast %4 : vector<1x8x32xf32> to vector<8x32xf32>
    %c0_8 = arith.constant 0 : index
    %c0_9 = arith.constant 0 : index
    %c0_10 = arith.constant 0 : index
    %6 = vector.load %arg4[%c0_8, %c0_9, %c0_10] : memref<1x8x8xf32, #tpu.memory_space<vmem>>, vector<1x8x8xf32>
    %7 = vector.shape_cast %6 : vector<1x8x8xf32> to vector<8x8xf32>
    %c0_11 = arith.constant 0 : index
    %c0_12 = arith.constant 0 : index
    %c0_13 = arith.constant 0 : index
    %8 = vector.load %arg5[%c0_11, %c0_12, %c0_13] : memref<1x8x8xf32, #tpu.memory_space<vmem>>, vector<1x8x8xf32>
    %9 = vector.shape_cast %8 : vector<1x8x8xf32> to vector<8x8xf32>
    %c0_14 = arith.constant 0 : index
    %c0_15 = arith.constant 0 : index
    %10 = vector.load %arg6[%c0_14, %c0_15] : memref<192x32xbf16, #tpu.memory_space<vmem>>, vector<32x32xbf16>
    %c32 = arith.constant 32 : index
    %c0_16 = arith.constant 0 : index
    %11 = vector.load %arg6[%c32, %c0_16] : memref<192x32xbf16, #tpu.memory_space<vmem>>, vector<32x32xbf16>
    %c64 = arith.constant 64 : index
    %c0_17 = arith.constant 0 : index
    %12 = vector.load %arg6[%c64, %c0_17] : memref<192x32xbf16, #tpu.memory_space<vmem>>, vector<128x32xbf16>
    %c0_18 = arith.constant 0 : index
    %c0_19 = arith.constant 0 : index
    %13 = vector.load %arg7[%c0_18, %c0_19] : memref<32x128xbf16, #tpu.memory_space<vmem>>, vector<32x128xbf16>
    %c0_20 = arith.constant 0 : index
    %c0_21 = arith.constant 0 : index
    %14 = vector.load %arg8[%c0_20, %c0_21] : memref<10x128xf32, #tpu.memory_space<vmem>>, vector<10x128xf32>
    %15 = vector.extract_strided_slice %14 {offsets = [0, 0], sizes = [1, 32], strides = [1, 1]} : vector<10x128xf32> to vector<1x32xf32>
    %16 = vector.extract_strided_slice %14 {offsets = [1, 0], sizes = [1, 32], strides = [1, 1]} : vector<10x128xf32> to vector<1x32xf32>
    %17 = vector.extract_strided_slice %14 {offsets = [2, 0], sizes = [1, 32], strides = [1, 1]} : vector<10x128xf32> to vector<1x32xf32>
    %18 = vector.extract_strided_slice %14 {offsets = [3, 0], sizes = [1, 32], strides = [1, 1]} : vector<10x128xf32> to vector<1x32xf32>
    %19 = vector.extract_strided_slice %14 {offsets = [4, 0], sizes = [1, 32], strides = [1, 1]} : vector<10x128xf32> to vector<1x32xf32>
    %20 = vector.extract_strided_slice %14 {offsets = [5, 0], sizes = [1, 32], strides = [1, 1]} : vector<10x128xf32> to vector<1x32xf32>
    %21 = vector.extract_strided_slice %14 {offsets = [6, 0], sizes = [1, 32], strides = [1, 1]} : vector<10x128xf32> to vector<1x32xf32>
    %22 = vector.extract_strided_slice %14 {offsets = [7, 0], sizes = [1, 32], strides = [1, 1]} : vector<10x128xf32> to vector<1x32xf32>
    %23 = vector.extract_strided_slice %14 {offsets = [8, 0], sizes = [1, 32], strides = [1, 1]} : vector<10x128xf32> to vector<1x32xf32>
    %24 = vector.extract_strided_slice %14 {offsets = [9, 0], sizes = [1, 128], strides = [1, 1]} : vector<10x128xf32> to vector<1x128xf32>
    %25 = tpu.iota {dimensions = array<i32: 1>} : vector<8x32xi32>
    %26 = tpu.iota {dimensions = array<i32: 0>} : vector<8x32xi32>
    %c4_i32 = arith.constant 4 : i32
    %27 = vector.broadcast %c4_i32 : i32 to vector<8x32xi32>
    %28 = arith.muli %26, %27 : vector<8x32xi32>
    %29 = arith.cmpi sge, %25, %28 : vector<8x32xi32>
    %c1_i32 = arith.constant 1 : i32
    %30 = vector.broadcast %c1_i32 : i32 to vector<8x32xi32>
    %31 = arith.addi %26, %30 : vector<8x32xi32>
    %c4_i32_22 = arith.constant 4 : i32
    %32 = vector.broadcast %c4_i32_22 : i32 to vector<8x32xi32>
    %33 = arith.muli %31, %32 : vector<8x32xi32>
    %34 = arith.cmpi slt, %25, %33 : vector<8x32xi32>
    %35 = arith.andi %29, %34 : vector<8x32xi1>
    %36 = arith.extui %35 : vector<8x32xi1> to vector<8x32xi32>
    %37 = arith.sitofp %36 : vector<8x32xi32> to vector<8x32xf32>
    %38 = arith.truncf %37 : vector<8x32xf32> to vector<8x32xbf16>
    %cst = arith.constant 0.176776692 : f32
    %39 = vector.broadcast %cst : f32 to vector<8x32xf32>
    %40 = arith.mulf %1, %39 : vector<8x32xf32>
    %41 = arith.truncf %40 : vector<8x32xf32> to vector<8x32xbf16>
    %42 = vector.shape_cast %41 : vector<8x32xbf16> to vector<1x8x32xbf16>
    %43 = vector.shape_cast %38 : vector<8x32xbf16> to vector<8x1x32xbf16>
    %44 = vector.broadcast %42 : vector<1x8x32xbf16> to vector<8x8x32xbf16>
    %45 = vector.broadcast %43 : vector<8x1x32xbf16> to vector<8x8x32xbf16>
    %46 = arith.mulf %44, %45 : vector<8x8x32xbf16>
    %47 = vector.shape_cast %46 : vector<8x8x32xbf16> to vector<64x32xbf16>
    %48 = arith.truncf %1 : vector<8x32xf32> to vector<8x32xbf16>
    "tpu.trace_start"() <{level = 10 : i32, message = "qe,ke->qk"}> : () -> ()
    %cst_23 = arith.constant dense<0.000000e+00> : vector<64x8xf32>
    %49 = tpu.matmul %47, %48, %cst_23 {dimension_numbers = #tpu.dot_dimension_numbers<[1], [1], [0], [0], [0, 0, 1, 0], [], []>} : vector<64x32xbf16>, vector<8x32xbf16>, vector<64x8xf32> -> vector<64x8xf32>
    "tpu.trace_stop"() : () -> ()
    %50 = vector.shape_cast %7 : vector<8x8xf32> to vector<1x8x8xf32>
    %51 = vector.shape_cast %50 : vector<1x8x8xf32> to vector<1x8x8xf32>
    %52 = vector.broadcast %51 : vector<1x8x8xf32> to vector<8x8x8xf32>
    %53 = vector.shape_cast %52 : vector<8x8x8xf32> to vector<64x8xf32>
    %cst_24 = arith.constant 0.000000e+00 : f32
    %54 = vector.broadcast %cst_24 : f32 to vector<64x8xf32>
    %55 = arith.cmpf oeq, %53, %54 : vector<64x8xf32>
    %cst_25 = arith.constant -1.000000e+20 : f32
    %56 = vector.broadcast %cst_25 : f32 to vector<64x8xf32>
    %57 = arith.select %55, %56, %49 : vector<64x8xi1>, vector<64x8xf32>
    %cst_26 = arith.constant dense<0xFF800000> : vector<64xf32>
    %58 = vector.multi_reduction <maximumf>, %57, %cst_26 [1] : vector<64x8xf32> to vector<64xf32>
    %59 = vector.shape_cast %58 : vector<64xf32> to vector<64x1xf32>
    %60 = vector.broadcast %59 : vector<64x1xf32> to vector<64x8xf32>
    %61 = arith.subf %57, %60 : vector<64x8xf32>
    %62 = math.exp %61 : vector<64x8xf32>
    %cst_27 = arith.constant dense<0.000000e+00> : vector<64xf32>
    %63 = vector.multi_reduction <add>, %62, %cst_27 [1] : vector<64x8xf32> to vector<64xf32>
    %64 = vector.shape_cast %63 : vector<64xf32> to vector<64x1xf32>
    %cst_28 = arith.constant 1.000000e-30 : f32
    %65 = vector.broadcast %cst_28 : f32 to vector<64x1xf32>
    %66 = arith.maximumf %64, %65 : vector<64x1xf32>
    %67 = tpu.reciprocal %66 {approx = true} : vector<64x1xf32> -> vector<64x1xf32>
    %68 = vector.broadcast %67 : vector<64x1xf32> to vector<64x8xf32>
    %69 = arith.mulf %62, %68 : vector<64x8xf32>
    %70 = arith.truncf %69 : vector<64x8xf32> to vector<64x8xbf16>
    %71 = arith.truncf %1 : vector<8x32xf32> to vector<8x32xbf16>
    %cst_29 = arith.constant dense<0.000000e+00> : vector<64x32xf32>
    %72 = tpu.matmul %70, %71, %cst_29 {dimension_numbers = #tpu.dot_dimension_numbers<[1], [0], [0], [1], [0, 0, 1, 1], [], []>} : vector<64x8xbf16>, vector<8x32xbf16>, vector<64x32xf32> -> vector<64x32xf32>
    %73 = vector.shape_cast %72 : vector<64x32xf32> to vector<8x8x32xf32>
    %74 = vector.shape_cast %37 : vector<8x32xf32> to vector<8x1x32xf32>
    %75 = vector.broadcast %74 : vector<8x1x32xf32> to vector<8x8x32xf32>
    %76 = arith.mulf %73, %75 : vector<8x8x32xf32>
    %cst_30 = arith.constant dense<0.000000e+00> : vector<8x32xf32>
    %77 = vector.multi_reduction <add>, %76, %cst_30 [0] : vector<8x8x32xf32> to vector<8x32xf32>
    %78 = arith.truncf %77 : vector<8x32xf32> to vector<8x32xbf16>
    %cst_31 = arith.constant dense<0.000000e+00> : vector<8x32xf32>
    %79 = tpu.matmul %78, %10, %cst_31 {dimension_numbers = #tpu.dot_dimension_numbers<[1], [0], [0], [1], [0, 0, 1, 1], [], []>} : vector<8x32xbf16>, vector<32x32xbf16>, vector<8x32xf32> -> vector<8x32xf32>
    %80 = vector.broadcast %15 : vector<1x32xf32> to vector<8x32xf32>
    %81 = arith.addf %79, %80 : vector<8x32xf32>
    %82 = arith.addf %81, %1 : vector<8x32xf32>
    %cst_32 = arith.constant dense<0.000000e+00> : vector<8xf32>
    %83 = vector.multi_reduction <add>, %82, %cst_32 [1] : vector<8x32xf32> to vector<8xf32>
    %84 = vector.shape_cast %83 : vector<8xf32> to vector<8x1xf32>
    %cst_33 = arith.constant 3.200000e+01 : f32
    %85 = vector.broadcast %cst_33 : f32 to vector<8x1xf32>
    %86 = arith.divf %84, %85 : vector<8x1xf32>
    %87 = vector.broadcast %86 : vector<8x1xf32> to vector<8x32xf32>
    %88 = arith.subf %82, %87 : vector<8x32xf32>
    %89 = arith.mulf %88, %88 : vector<8x32xf32>
    %cst_34 = arith.constant dense<0.000000e+00> : vector<8xf32>
    %90 = vector.multi_reduction <add>, %89, %cst_34 [1] : vector<8x32xf32> to vector<8xf32>
    %91 = vector.shape_cast %90 : vector<8xf32> to vector<8x1xf32>
    %cst_35 = arith.constant 3.200000e+01 : f32
    %92 = vector.broadcast %cst_35 : f32 to vector<8x1xf32>
    %93 = arith.divf %91, %92 : vector<8x1xf32>
    %cst_36 = arith.constant 9.99999974E-6 : f32
    %94 = vector.broadcast %cst_36 : f32 to vector<8x1xf32>
    %95 = arith.addf %93, %94 : vector<8x1xf32>
    %96 = math.rsqrt %95 : vector<8x1xf32>
    %97 = vector.broadcast %96 : vector<8x1xf32> to vector<8x32xf32>
    %98 = arith.mulf %88, %97 : vector<8x32xf32>
    %99 = vector.broadcast %16 : vector<1x32xf32> to vector<8x32xf32>
    %100 = arith.mulf %98, %99 : vector<8x32xf32>
    %101 = vector.broadcast %17 : vector<1x32xf32> to vector<8x32xf32>
    %102 = arith.addf %100, %101 : vector<8x32xf32>
    %cst_37 = arith.constant 0.176776692 : f32
    %103 = vector.broadcast %cst_37 : f32 to vector<8x32xf32>
    %104 = arith.mulf %102, %103 : vector<8x32xf32>
    %105 = arith.truncf %104 : vector<8x32xf32> to vector<8x32xbf16>
    %106 = vector.shape_cast %105 : vector<8x32xbf16> to vector<1x8x32xbf16>
    %107 = vector.shape_cast %38 : vector<8x32xbf16> to vector<8x1x32xbf16>
    %108 = vector.broadcast %106 : vector<1x8x32xbf16> to vector<8x8x32xbf16>
    %109 = vector.broadcast %107 : vector<8x1x32xbf16> to vector<8x8x32xbf16>
    %110 = arith.mulf %108, %109 : vector<8x8x32xbf16>
    %111 = vector.shape_cast %110 : vector<8x8x32xbf16> to vector<64x32xbf16>
    %112 = arith.truncf %3 : vector<8x32xf32> to vector<8x32xbf16>
    "tpu.trace_start"() <{level = 10 : i32, message = "qe,ke->qk"}> : () -> ()
    %cst_38 = arith.constant dense<0.000000e+00> : vector<64x8xf32>
    %113 = tpu.matmul %111, %112, %cst_38 {dimension_numbers = #tpu.dot_dimension_numbers<[1], [1], [0], [0], [0, 0, 1, 0], [], []>} : vector<64x32xbf16>, vector<8x32xbf16>, vector<64x8xf32> -> vector<64x8xf32>
    "tpu.trace_stop"() : () -> ()
    %114 = vector.shape_cast %9 : vector<8x8xf32> to vector<1x8x8xf32>
    %115 = vector.shape_cast %114 : vector<1x8x8xf32> to vector<1x8x8xf32>
    %116 = vector.broadcast %115 : vector<1x8x8xf32> to vector<8x8x8xf32>
    %117 = vector.shape_cast %116 : vector<8x8x8xf32> to vector<64x8xf32>
    %cst_39 = arith.constant 0.000000e+00 : f32
    %118 = vector.broadcast %cst_39 : f32 to vector<64x8xf32>
    %119 = arith.cmpf oeq, %117, %118 : vector<64x8xf32>
    %cst_40 = arith.constant -1.000000e+20 : f32
    %120 = vector.broadcast %cst_40 : f32 to vector<64x8xf32>
    %121 = arith.select %119, %120, %113 : vector<64x8xi1>, vector<64x8xf32>
    %cst_41 = arith.constant dense<0xFF800000> : vector<64xf32>
    %122 = vector.multi_reduction <maximumf>, %121, %cst_41 [1] : vector<64x8xf32> to vector<64xf32>
    %123 = vector.shape_cast %122 : vector<64xf32> to vector<64x1xf32>
    %124 = vector.broadcast %123 : vector<64x1xf32> to vector<64x8xf32>
    %125 = arith.subf %121, %124 : vector<64x8xf32>
    %126 = math.exp %125 : vector<64x8xf32>
    %cst_42 = arith.constant dense<0.000000e+00> : vector<64xf32>
    %127 = vector.multi_reduction <add>, %126, %cst_42 [1] : vector<64x8xf32> to vector<64xf32>
    %128 = vector.shape_cast %127 : vector<64xf32> to vector<64x1xf32>
    %cst_43 = arith.constant 1.000000e-30 : f32
    %129 = vector.broadcast %cst_43 : f32 to vector<64x1xf32>
    %130 = arith.maximumf %128, %129 : vector<64x1xf32>
    %131 = tpu.reciprocal %130 {approx = true} : vector<64x1xf32> -> vector<64x1xf32>
    %132 = vector.broadcast %131 : vector<64x1xf32> to vector<64x8xf32>
    %133 = arith.mulf %126, %132 : vector<64x8xf32>
    %134 = arith.truncf %133 : vector<64x8xf32> to vector<64x8xbf16>
    %135 = arith.truncf %5 : vector<8x32xf32> to vector<8x32xbf16>
    %cst_44 = arith.constant dense<0.000000e+00> : vector<64x32xf32>
    %136 = tpu.matmul %134, %135, %cst_44 {dimension_numbers = #tpu.dot_dimension_numbers<[1], [0], [0], [1], [0, 0, 1, 1], [], []>} : vector<64x8xbf16>, vector<8x32xbf16>, vector<64x32xf32> -> vector<64x32xf32>
    %137 = vector.shape_cast %136 : vector<64x32xf32> to vector<8x8x32xf32>
    %138 = vector.shape_cast %37 : vector<8x32xf32> to vector<8x1x32xf32>
    %139 = vector.broadcast %138 : vector<8x1x32xf32> to vector<8x8x32xf32>
    %140 = arith.mulf %137, %139 : vector<8x8x32xf32>
    %cst_45 = arith.constant dense<0.000000e+00> : vector<8x32xf32>
    %141 = vector.multi_reduction <add>, %140, %cst_45 [0] : vector<8x8x32xf32> to vector<8x32xf32>
    %142 = arith.truncf %141 : vector<8x32xf32> to vector<8x32xbf16>
    %cst_46 = arith.constant dense<0.000000e+00> : vector<8x32xf32>
    %143 = tpu.matmul %142, %11, %cst_46 {dimension_numbers = #tpu.dot_dimension_numbers<[1], [0], [0], [1], [0, 0, 1, 1], [], []>} : vector<8x32xbf16>, vector<32x32xbf16>, vector<8x32xf32> -> vector<8x32xf32>
    %144 = vector.broadcast %18 : vector<1x32xf32> to vector<8x32xf32>
    %145 = arith.addf %143, %144 : vector<8x32xf32>
    %146 = arith.addf %145, %102 : vector<8x32xf32>
    %cst_47 = arith.constant dense<0.000000e+00> : vector<8xf32>
    %147 = vector.multi_reduction <add>, %146, %cst_47 [1] : vector<8x32xf32> to vector<8xf32>
    %148 = vector.shape_cast %147 : vector<8xf32> to vector<8x1xf32>
    %cst_48 = arith.constant 3.200000e+01 : f32
    %149 = vector.broadcast %cst_48 : f32 to vector<8x1xf32>
    %150 = arith.divf %148, %149 : vector<8x1xf32>
    %151 = vector.broadcast %150 : vector<8x1xf32> to vector<8x32xf32>
    %152 = arith.subf %146, %151 : vector<8x32xf32>
    %153 = arith.mulf %152, %152 : vector<8x32xf32>
    %cst_49 = arith.constant dense<0.000000e+00> : vector<8xf32>
    %154 = vector.multi_reduction <add>, %153, %cst_49 [1] : vector<8x32xf32> to vector<8xf32>
    %155 = vector.shape_cast %154 : vector<8xf32> to vector<8x1xf32>
    %cst_50 = arith.constant 3.200000e+01 : f32
    %156 = vector.broadcast %cst_50 : f32 to vector<8x1xf32>
    %157 = arith.divf %155, %156 : vector<8x1xf32>
    %cst_51 = arith.constant 9.99999974E-6 : f32
    %158 = vector.broadcast %cst_51 : f32 to vector<8x1xf32>
    %159 = arith.addf %157, %158 : vector<8x1xf32>
    %160 = math.rsqrt %159 : vector<8x1xf32>
    %161 = vector.broadcast %160 : vector<8x1xf32> to vector<8x32xf32>
    %162 = arith.mulf %152, %161 : vector<8x32xf32>
    %163 = vector.broadcast %19 : vector<1x32xf32> to vector<8x32xf32>
    %164 = arith.mulf %162, %163 : vector<8x32xf32>
    %165 = vector.broadcast %20 : vector<1x32xf32> to vector<8x32xf32>
    %166 = arith.addf %164, %165 : vector<8x32xf32>
    %cst_52 = arith.constant dense<0.000000e+00> : vector<8xf32>
    %167 = vector.multi_reduction <add>, %166, %cst_52 [1] : vector<8x32xf32> to vector<8xf32>
    %168 = vector.shape_cast %167 : vector<8xf32> to vector<8x1xf32>
    %cst_53 = arith.constant 3.200000e+01 : f32
    %169 = vector.broadcast %cst_53 : f32 to vector<8x1xf32>
    %170 = arith.divf %168, %169 : vector<8x1xf32>
    %171 = vector.broadcast %170 : vector<8x1xf32> to vector<8x32xf32>
    %172 = arith.subf %166, %171 : vector<8x32xf32>
    %173 = arith.mulf %172, %172 : vector<8x32xf32>
    %cst_54 = arith.constant dense<0.000000e+00> : vector<8xf32>
    %174 = vector.multi_reduction <add>, %173, %cst_54 [1] : vector<8x32xf32> to vector<8xf32>
    %175 = vector.shape_cast %174 : vector<8xf32> to vector<8x1xf32>
    %cst_55 = arith.constant 3.200000e+01 : f32
    %176 = vector.broadcast %cst_55 : f32 to vector<8x1xf32>
    %177 = arith.divf %175, %176 : vector<8x1xf32>
    %cst_56 = arith.constant 9.99999974E-6 : f32
    %178 = vector.broadcast %cst_56 : f32 to vector<8x1xf32>
    %179 = arith.addf %177, %178 : vector<8x1xf32>
    %180 = math.rsqrt %179 : vector<8x1xf32>
    %181 = vector.broadcast %180 : vector<8x1xf32> to vector<8x32xf32>
    %182 = arith.mulf %172, %181 : vector<8x32xf32>
    %183 = vector.broadcast %19 : vector<1x32xf32> to vector<8x32xf32>
    %184 = arith.mulf %182, %183 : vector<8x32xf32>
    %185 = vector.broadcast %20 : vector<1x32xf32> to vector<8x32xf32>
    %186 = arith.addf %184, %185 : vector<8x32xf32>
    %187 = arith.truncf %186 : vector<8x32xf32> to vector<8x32xbf16>
    %cst_57 = arith.constant dense<0.000000e+00> : vector<8x128xf32>
    %188 = tpu.matmul %187, %13, %cst_57 {dimension_numbers = #tpu.dot_dimension_numbers<[1], [0], [0], [1], [0, 0, 1, 1], [], []>} : vector<8x32xbf16>, vector<32x128xbf16>, vector<8x128xf32> -> vector<8x128xf32>
    %189 = vector.broadcast %24 : vector<1x128xf32> to vector<8x128xf32>
    %190 = arith.addf %188, %189 : vector<8x128xf32>
    %cst_58 = arith.constant 0.000000e+00 : f32
    %191 = vector.broadcast %cst_58 : f32 to vector<8x128xf32>
    %192 = arith.maximumf %190, %191 : vector<8x128xf32>
    %193 = arith.truncf %192 : vector<8x128xf32> to vector<8x128xbf16>
    %cst_59 = arith.constant dense<0.000000e+00> : vector<8x32xf32>
    %194 = tpu.matmul %193, %12, %cst_59 {dimension_numbers = #tpu.dot_dimension_numbers<[1], [0], [0], [1], [0, 0, 1, 1], [], []>} : vector<8x128xbf16>, vector<128x32xbf16>, vector<8x32xf32> -> vector<8x32xf32>
    %195 = vector.broadcast %21 : vector<1x32xf32> to vector<8x32xf32>
    %196 = arith.addf %194, %195 : vector<8x32xf32>
    %197 = arith.addf %196, %186 : vector<8x32xf32>
    %cst_60 = arith.constant dense<0.000000e+00> : vector<8xf32>
    %198 = vector.multi_reduction <add>, %197, %cst_60 [1] : vector<8x32xf32> to vector<8xf32>
    %199 = vector.shape_cast %198 : vector<8xf32> to vector<8x1xf32>
    %cst_61 = arith.constant 3.200000e+01 : f32
    %200 = vector.broadcast %cst_61 : f32 to vector<8x1xf32>
    %201 = arith.divf %199, %200 : vector<8x1xf32>
    %202 = vector.broadcast %201 : vector<8x1xf32> to vector<8x32xf32>
    %203 = arith.subf %197, %202 : vector<8x32xf32>
    %204 = arith.mulf %203, %203 : vector<8x32xf32>
    %cst_62 = arith.constant dense<0.000000e+00> : vector<8xf32>
    %205 = vector.multi_reduction <add>, %204, %cst_62 [1] : vector<8x32xf32> to vector<8xf32>
    %206 = vector.shape_cast %205 : vector<8xf32> to vector<8x1xf32>
    %cst_63 = arith.constant 3.200000e+01 : f32
    %207 = vector.broadcast %cst_63 : f32 to vector<8x1xf32>
    %208 = arith.divf %206, %207 : vector<8x1xf32>
    %cst_64 = arith.constant 9.99999974E-6 : f32
    %209 = vector.broadcast %cst_64 : f32 to vector<8x1xf32>
    %210 = arith.addf %208, %209 : vector<8x1xf32>
    %211 = math.rsqrt %210 : vector<8x1xf32>
    %212 = vector.broadcast %211 : vector<8x1xf32> to vector<8x32xf32>
    %213 = arith.mulf %203, %212 : vector<8x32xf32>
    %214 = vector.broadcast %22 : vector<1x32xf32> to vector<8x32xf32>
    %215 = arith.mulf %213, %214 : vector<8x32xf32>
    %216 = vector.broadcast %23 : vector<1x32xf32> to vector<8x32xf32>
    %217 = arith.addf %215, %216 : vector<8x32xf32>
    %c0_65 = arith.constant 0 : index
    %c0_66 = arith.constant 0 : index
    %c0_67 = arith.constant 0 : index
    %218 = vector.load %arg9[%c0_65, %c0_66, %c0_67] : memref<1x8x32xf32, #tpu.memory_space<vmem>>, vector<1x8x32xf32>
    %219 = vector.shape_cast %218 : vector<1x8x32xf32> to vector<8x32xf32>
    %220 = vector.shape_cast %217 : vector<8x32xf32> to vector<1x8x32xf32>
    tpu.vector_store %arg9[%c0_65, %c0_66, %c0_67], %220 {strides = array<i32>} : memref<1x8x32xf32, #tpu.memory_space<vmem>>, vector<1x8x32xf32>,
    return
  }
  func.func @transform_0(%arg0: i32) -> (i32, i32, i32) {
    %c0_i32 = arith.constant 0 : i32
    %c0_i32_0 = arith.constant 0 : i32
    %c0_i32_1 = arith.constant 0 : i32
    return %arg0, %c0_i32, %c0_i32_0 : i32, i32, i32
  }
  func.func @transform_1(%arg0: i32) -> (i32, i32, i32) {
    %c0_i32 = arith.constant 0 : i32
    %c0_i32_0 = arith.constant 0 : i32
    %c0_i32_1 = arith.constant 0 : i32
    return %arg0, %c0_i32, %c0_i32_0 : i32, i32, i32
  }
  func.func @transform_2(%arg0: i32) -> (i32, i32, i32) {
    %c0_i32 = arith.constant 0 : i32
    %c0_i32_0 = arith.constant 0 : i32
    %c0_i32_1 = arith.constant 0 : i32
    return %arg0, %c0_i32, %c0_i32_0 : i32, i32, i32
  }
  func.func @transform_3(%arg0: i32) -> (i32, i32, i32) {
    %c0_i32 = arith.constant 0 : i32
    %c0_i32_0 = arith.constant 0 : i32
    %c0_i32_1 = arith.constant 0 : i32
    return %arg0, %c0_i32, %c0_i32_0 : i32, i32, i32
  }
  func.func @transform_4(%arg0: i32) -> (i32, i32, i32) {
    %c0_i32 = arith.constant 0 : i32
    %c0_i32_0 = arith.constant 0 : i32
    %c0_i32_1 = arith.constant 0 : i32
    return %arg0, %c0_i32, %c0_i32_0 : i32, i32, i32
  }
  func.func @transform_5(%arg0: i32) -> (i32, i32) {
    %c0_i32 = arith.constant 0 : i32
    %c0_i32_0 = arith.constant 0 : i32
    %c0_i32_1 = arith.constant 0 : i32
    return %c0_i32, %c0_i32_0 : i32, i32
  }
  func.func @transform_6(%arg0: i32) -> (i32, i32) {
    %c0_i32 = arith.constant 0 : i32
    %c0_i32_0 = arith.constant 0 : i32
    %c0_i32_1 = arith.constant 0 : i32
    return %c0_i32, %c0_i32_0 : i32, i32
  }
  func.func @transform_7(%arg0: i32) -> (i32, i32) {
    %c0_i32 = arith.constant 0 : i32
    %c0_i32_0 = arith.constant 0 : i32
    %c0_i32_1 = arith.constant 0 : i32
    return %c0_i32, %c0_i32_0 : i32, i32
  }
  func.func @transform_8(%arg0: i32) -> (i32, i32, i32) {
    %c0_i32 = arith.constant 0 : i32
    %c0_i32_0 = arith.constant 0 : i32
    %c0_i32_1 = arith.constant 0 : i32
    return %arg0, %c0_i32, %c0_i32_0 : i32, i32, i32
  }
}

</mosaic_0001>

<llo_original>
// kernel: tpu_custom_call.1
$region0: #{tpu_custom_call.1}
  #allocation0 [shape = 'u32[]', space=smem, size = 0x4, offset = 0x4, fixed_abs, tag = 'smem constant byte address 0x4 - core index']
  #allocation1 [shape = 'u32[144,128]{1,0:T(1,128)}', space=vmem, size = 0x12000, scoped, tag = 'internal scratch']
  %s0 = inlined_call_operand.vmem [shape: f32[2,8,32], index: 0, kind: input, shape index: {}]
  %s1 = inlined_call_operand.vmem [shape: f32[2,8,32], index: 1, kind: input, shape index: {}]
  %s2 = inlined_call_operand.vmem [shape: f32[2,8,32], index: 2, kind: input, shape index: {}]
  %s3 = inlined_call_operand.vmem [shape: f32[2,8,8], index: 3, kind: input, shape index: {}]
  %s4 = inlined_call_operand.vmem [shape: f32[2,8,8], index: 4, kind: input, shape index: {}]
  %s5 = inlined_call_operand.vmem [shape: bf16[192,32], index: 5, kind: input, shape index: {}]
  %s6 = inlined_call_operand.vmem [shape: bf16[32,128], index: 6, kind: input, shape index: {}]
  %s7 = inlined_call_operand.vmem [shape: f32[10,128], index: 7, kind: input, shape index: {}]
  %s8 = inlined_call_operand.hbm [shape: f32[2,8,32], index: 8, kind: output, shape index: {}]
  %s9 = sld [smem:[#allocation0]]
  $region65: #{tpu_custom_call.1} parent=0
    _
  %s11 = ssub.s32 1, %s9
  %s12 = scalar_select 0, %s11, %s9
  $region1: #{tpu_custom_call.1} parent=0
    #allocation2 [shape = 'u8[8192]{0}', space=vmem, size = 0x2000, scoped, tag = 'output window, operand 0']
    #allocation3 [shape = 's32[2]{0}', space=sflag, size = 0x8, scoped, tag = 'scoped memory for tpu_custom_call.1']
    %13 = vsyncpa [#allocation3], 0
    %s14 = scalar_lea.sflag [#allocation3], 1
    %15 = vsyncpa %s14, 0
    loop: start=0, step=1, limit=4
    $region2: #{tpu_custom_call.1} parent=1 // loop_pre_header
      _
    $region3: #{tpu_custom_call.1} parent=1 // loop_header
      %s17 = sphi 0, %s21
      %p18 = scmp.ge.s32.totalorder %s17, 4
      %s27 = sphi 0, %s29
      %s30 = sphi 0, %s27
      %s31 = sphi 0, %s30
      %s47 = sphi 0, %s31
      %s53 = sphi 0, %s55
      %s56 = sphi 0, %s53
      %s57 = sphi 0, %s56
      %s73 = sphi 0, %s57
      %s79 = sphi 0, %s81
      %s82 = sphi 0, %s79
      %s83 = sphi 0, %s82
      %s99 = sphi 0, %s83
      %s105 = sphi 0, %s107
      %s108 = sphi 0, %s105
      %s109 = sphi 0, %s108
      %s125 = sphi 0, %s109
      %s131 = sphi 0, %s133
      %s134 = sphi 0, %s131
      %s135 = sphi 0, %s134
      %s151 = sphi 0, %s135
      %s155 = sphi 0, %s155
      %s157 = sphi 0, %s155
      %s158 = sphi 0, %s157
      %s172 = sphi 0, %s158
      %s176 = sphi 0, %s176
      %s178 = sphi 0, %s176
      %s179 = sphi 0, %s178
      %s193 = sphi 0, %s179
      %s197 = sphi 0, %s197
      %s199 = sphi 0, %s197
      %s200 = sphi 0, %s199
      %s214 = sphi 0, %s200
      %s220 = sphi 0, %s222
      %s223 = sphi 0, %s220
      %s224 = sphi 0, %s223
      %s240 = sphi 0, %s224
    $region4: #{tpu_custom_call.1} parent=1 // loop_header_branch
      %20 = sbr.rel (%p18) target = $region8
    $region5: #{tpu_custom_call.1} parent=1 // loop_body
      %s22 = ssub.s32 %s17, 1
      %s23 = ssub.s32 %s17, 2
      %s24 = sadd.s32 %s17, 1
      %s25 = ssub.s32 %s17, %s24
      %p26 = scmp.eq.s32.totalorder %s25, 0
      %s28 = sadd.s32 %s27, 1
      %s29 = scalar_select %p26, %s27, %s28
      %p32 = pneg %p26
      %p33 = scmp.eq.s32.totalorder %s17, 1
      %p34 = por %p32, %p33
      %p35 = scmp.ne.s32.totalorder %s27, %s30
      %p36 = scmp.eq.s32.totalorder %s17, 0
      %p37 = por %p35, %p36
      %p38 = scmp.ne.s32.totalorder %s27, %s30
      %p39 = scmp.eq.s32.totalorder %s22, 1
      %p40 = por %p38, %p39
      %p41 = scmp.ne.s32.totalorder %s30, %s31
      %p42 = scmp.eq.s32.totalorder %s22, 0
      %p43 = por %p41, %p42
      %p44 = scmp.ne.s32.totalorder %s30, %s31
      %p45 = scmp.eq.s32.totalorder %s23, 1
      %p46 = por %p44, %p45
      %p48 = scmp.ne.s32.totalorder %s31, %s47
      %p49 = scmp.eq.s32.totalorder %s23, 0
      %p50 = por %p48, %p49
      %s51 = ssub.s32 %s17, %s24
      %p52 = scmp.eq.s32.totalorder %s51, 0
      %s54 = sadd.s32 %s53, 1
      %s55 = scalar_select %p52, %s53, %s54
      %p58 = pneg %p52
      %p59 = scmp.eq.s32.totalorder %s17, 1
      %p60 = por %p58, %p59
      %p61 = scmp.ne.s32.totalorder %s53, %s56
      %p62 = scmp.eq.s32.totalorder %s17, 0
      %p63 = por %p61, %p62
      %p64 = scmp.ne.s32.totalorder %s53, %s56
      %p65 = scmp.eq.s32.totalorder %s22, 1
      %p66 = por %p64, %p65
      %p67 = scmp.ne.s32.totalorder %s56, %s57
      %p68 = scmp.eq.s32.totalorder %s22, 0
      %p69 = por %p67, %p68
      %p70 = scmp.ne.s32.totalorder %s56, %s57
      %p71 = scmp.eq.s32.totalorder %s23, 1
      %p72 = por %p70, %p71
      %p74 = scmp.ne.s32.totalorder %s57, %s73
      %p75 = scmp.eq.s32.totalorder %s23, 0
      %p76 = por %p74, %p75
      %s77 = ssub.s32 %s17, %s24
      %p78 = scmp.eq.s32.totalorder %s77, 0
      %s80 = sadd.s32 %s79, 1
      %s81 = scalar_select %p78, %s79, %s80
      %p84 = pneg %p78
      %p85 = scmp.eq.s32.totalorder %s17, 1
      %p86 = por %p84, %p85
      %p87 = scmp.ne.s32.totalorder %s79, %s82
      %p88 = scmp.eq.s32.totalorder %s17, 0
      %p89 = por %p87, %p88
      %p90 = scmp.ne.s32.totalorder %s79, %s82
      %p91 = scmp.eq.s32.totalorder %s22, 1
      %p92 = por %p90, %p91
      %p93 = scmp.ne.s32.totalorder %s82, %s83
      %p94 = scmp.eq.s32.totalorder %s22, 0
      %p95 = por %p93, %p94
      %p96 = scmp.ne.s32.totalorder %s82, %s83
      %p97 = scmp.eq.s32.totalorder %s23, 1
      %p98 = por %p96, %p97
      %p100 = scmp.ne.s32.totalorder %s83, %s99
      %p101 = scmp.eq.s32.totalorder %s23, 0
      %p102 = por %p100, %p101
      %s103 = ssub.s32 %s17, %s24
      %p104 = scmp.eq.s32.totalorder %s103, 0
      %s106 = sadd.s32 %s105, 1
      %s107 = scalar_select %p104, %s105, %s106
      %p110 = pneg %p104
      %p111 = scmp.eq.s32.totalorder %s17, 1
      %p112 = por %p110, %p111
      %p113 = scmp.ne.s32.totalorder %s105, %s108
      %p114 = scmp.eq.s32.totalorder %s17, 0
      %p115 = por %p113, %p114
      %p116 = scmp.ne.s32.totalorder %s105, %s108
      %p117 = scmp.eq.s32.totalorder %s22, 1
      %p118 = por %p116, %p117
      %p119 = scmp.ne.s32.totalorder %s108, %s109
      %p120 = scmp.eq.s32.totalorder %s22, 0
      %p121 = por %p119, %p120
      %p122 = scmp.ne.s32.totalorder %s108, %s109
      %p123 = scmp.eq.s32.totalorder %s23, 1
      %p124 = por %p122, %p123
      %p126 = scmp.ne.s32.totalorder %s109, %s125
      %p127 = scmp.eq.s32.totalorder %s23, 0
      %p128 = por %p126, %p127
      %s129 = ssub.s32 %s17, %s24
      %p130 = scmp.eq.s32.totalorder %s129, 0
      %s132 = sadd.s32 %s131, 1
      %s133 = scalar_select %p130, %s131, %s132
      %p136 = pneg %p130
      %p137 = scmp.eq.s32.totalorder %s17, 1
      %p138 = por %p136, %p137
      %p139 = scmp.ne.s32.totalorder %s131, %s134
      %p140 = scmp.eq.s32.totalorder %s17, 0
      %p141 = por %p139, %p140
      %p142 = scmp.ne.s32.totalorder %s131, %s134
      %p143 = scmp.eq.s32.totalorder %s22, 1
      %p144 = por %p142, %p143
      %p145 = scmp.ne.s32.totalorder %s134, %s135
      %p146 = scmp.eq.s32.totalorder %s22, 0
      %p147 = por %p145, %p146
      %p148 = scmp.ne.s32.totalorder %s134, %s135
      %p149 = scmp.eq.s32.totalorder %s23, 1
      %p150 = por %p148, %p149
      %p152 = scmp.ne.s32.totalorder %s135, %s151
      %p153 = scmp.eq.s32.totalorder %s23, 0
      %p154 = por %p152, %p153
      %s156 = sadd.s32 %s155, 1
      %p159 = scmp.eq.s32.totalorder %s17, 1
      %p160 = scmp.ne.s32.totalorder %s155, %s157
      %p161 = scmp.eq.s32.totalorder %s17, 0
      %p162 = por %p160, %p161
      %p163 = scmp.ne.s32.totalorder %s155, %s157
      %p164 = scmp.eq.s32.totalorder %s22, 1
      %p165 = por %p163, %p164
      %p166 = scmp.ne.s32.totalorder %s157, %s158
      %p167 = scmp.eq.s32.totalorder %s22, 0
      %p168 = por %p166, %p167
      %p169 = scmp.ne.s32.totalorder %s157, %s158
      %p170 = scmp.eq.s32.totalorder %s23, 1
      %p171 = por %p169, %p170
      %p173 = scmp.ne.s32.totalorder %s158, %s172
      %p174 = scmp.eq.s32.totalorder %s23, 0
      %p175 = por %p173, %p174
      %s177 = sadd.s32 %s176, 1
      %p180 = scmp.eq.s32.totalorder %s17, 1
      %p181 = scmp.ne.s32.totalorder %s176, %s178
      %p182 = scmp.eq.s32.totalorder %s17, 0
      %p183 = por %p181, %p182
      %p184 = scmp.ne.s32.totalorder %s176, %s178
      %p185 = scmp.eq.s32.totalorder %s22, 1
      %p186 = por %p184, %p185
      %p187 = scmp.ne.s32.totalorder %s178, %s179
      %p188 = scmp.eq.s32.totalorder %s22, 0
      %p189 = por %p187, %p188
      %p190 = scmp.ne.s32.totalorder %s178, %s179
      %p191 = scmp.eq.s32.totalorder %s23, 1
      %p192 = por %p190, %p191
      %p194 = scmp.ne.s32.totalorder %s179, %s193
      %p195 = scmp.eq.s32.totalorder %s23, 0
      %p196 = por %p194, %p195
      %s198 = sadd.s32 %s197, 1
      %p201 = scmp.eq.s32.totalorder %s17, 1
      %p202 = scmp.ne.s32.totalorder %s197, %s199
      %p203 = scmp.eq.s32.totalorder %s17, 0
      %p204 = por %p202, %p203
      %p205 = scmp.ne.s32.totalorder %s197, %s199
      %p206 = scmp.eq.s32.totalorder %s22, 1
      %p207 = por %p205, %p206
      %p208 = scmp.ne.s32.totalorder %s199, %s200
      %p209 = scmp.eq.s32.totalorder %s22, 0
      %p210 = por %p208, %p209
      %p211 = scmp.ne.s32.totalorder %s199, %s200
      %p212 = scmp.eq.s32.totalorder %s23, 1
      %p213 = por %p211, %p212
      %p215 = scmp.ne.s32.totalorder %s200, %s214
      %p216 = scmp.eq.s32.totalorder %s23, 0
      %p217 = por %p215, %p216
      %s218 = ssub.s32 %s17, %s24
      %p219 = scmp.eq.s32.totalorder %s218, 0
      %s221 = sadd.s32 %s220, 1
      %s222 = scalar_select %p219, %s220, %s221
      %p225 = pneg %p219
      %p226 = scmp.eq.s32.totalorder %s17, 1
      %p227 = por %p225, %p226
      %p228 = scmp.ne.s32.totalorder %s220, %s223
      %p229 = scmp.eq.s32.totalorder %s17, 0
      %p230 = por %p228, %p229
      %p231 = scmp.ne.s32.totalorder %s220, %s223
      %p232 = scmp.eq.s32.totalorder %s22, 1
      %p233 = por %p231, %p232
      %p234 = scmp.ne.s32.totalorder %s223, %s224
      %p235 = scmp.eq.s32.totalorder %s22, 0
      %p236 = por %p234, %p235
      %p237 = scmp.ne.s32.totalorder %s223, %s224
      %p238 = scmp.eq.s32.totalorder %s23, 1
      %p239 = por %p237, %p238
      %p241 = scmp.ne.s32.totalorder %s224, %s240
      %p242 = scmp.eq.s32.totalorder %s23, 0
      %p243 = por %p241, %p242
      %p244 = scmp.le.s32.totalorder 1, %s17
      %p245 = scmp.lt.s32.totalorder %s17, 3
      %p246 = pnand %p244, %p245
      %p247 = pneg %p246
      // Predicated region
      $region9: #{tpu_custom_call.1} parent=5 // pred_check
        _
      $region10: #{tpu_custom_call.1} parent=5 // pred_check_branch
        %249 = sbr.rel (%p246) target = $region12
      $region11: #{tpu_custom_call.1} parent=5 // pred_region
        %s250 = ssub.s32 %s17, 1
        // Predicated region
        $region13: #{tpu_custom_call.1} parent=11 // pred_check
          %p251 = pneg %p168
        $region14: #{tpu_custom_call.1} parent=11 // pred_check_branch
          %253 = sbr.rel (%p251) target = $region16
        $region15: #{tpu_custom_call.1} parent=11 // pred_region
          _
        $region16: #{tpu_custom_call.1} parent=11 // pred_fallthru
          _
        // Predicated region
        $region17: #{tpu_custom_call.1} parent=11 // pred_check
          %p254 = pneg %p189
        $region18: #{tpu_custom_call.1} parent=11 // pred_check_branch
          %256 = sbr.rel (%p254) target = $region20
        $region19: #{tpu_custom_call.1} parent=11 // pred_region
          _
        $region20: #{tpu_custom_call.1} parent=11 // pred_fallthru
          _
        // Predicated region
        $region21: #{tpu_custom_call.1} parent=11 // pred_check
          %p257 = pneg %p210
        $region22: #{tpu_custom_call.1} parent=11 // pred_check_branch
          %259 = sbr.rel (%p257) target = $region24
        $region23: #{tpu_custom_call.1} parent=11 // pred_region
          _
        $region24: #{tpu_custom_call.1} parent=11 // pred_fallthru
          _
      $region12: #{tpu_custom_call.1} parent=5 // pred_fallthru
        _
      %p260 = scmp.lt.s32.totalorder %s17, 2
      // Predicated region
      $region25: #{tpu_custom_call.1} parent=5 // pred_check
        %p261 = pneg %p260
      $region26: #{tpu_custom_call.1} parent=5 // pred_check_branch
        %263 = sbr.rel (%p261) target = $region28
      $region27: #{tpu_custom_call.1} parent=5 // pred_region
        // Predicated region
        $region29: #{tpu_custom_call.1} parent=27 // pred_check
          %p264 = pneg %p37
        $region30: #{tpu_custom_call.1} parent=27 // pred_check_branch
          %266 = sbr.rel (%p264) target = $region32
        $region31: #{tpu_custom_call.1} parent=27 // pred_region
          %p267 = scmp.lt.s32.totalorder %s17, 1
          %s268 = scalar_select %p267, %s17, 1
          %s269 = smul.addr %s268, 8
          %s270 = scalar_lea.vmem %s0, %s269
        $region32: #{tpu_custom_call.1} parent=27 // pred_fallthru
          _
        // Predicated region
        $region33: #{tpu_custom_call.1} parent=27 // pred_check
          %p271 = pneg %p63
        $region34: #{tpu_custom_call.1} parent=27 // pred_check_branch
          %273 = sbr.rel (%p271) target = $region36
        $region35: #{tpu_custom_call.1} parent=27 // pred_region
          %p274 = scmp.lt.s32.totalorder %s17, 1
          %s275 = scalar_select %p274, %s17, 1
          %s276 = smul.addr %s275, 8
          %s277 = scalar_lea.vmem %s1, %s276
        $region36: #{tpu_custom_call.1} parent=27 // pred_fallthru
          _
        // Predicated region
        $region37: #{tpu_custom_call.1} parent=27 // pred_check
          %p278 = pneg %p89
        $region38: #{tpu_custom_call.1} parent=27 // pred_check_branch
          %280 = sbr.rel (%p278) target = $region40
        $region39: #{tpu_custom_call.1} parent=27 // pred_region
          %p281 = scmp.lt.s32.totalorder %s17, 1
          %s282 = scalar_select %p281, %s17, 1
          %s283 = smul.addr %s282, 8
          %s284 = scalar_lea.vmem %s2, %s283
        $region40: #{tpu_custom_call.1} parent=27 // pred_fallthru
          _
        // Predicated region
        $region41: #{tpu_custom_call.1} parent=27 // pred_check
          %p285 = pneg %p115
        $region42: #{tpu_custom_call.1} parent=27 // pred_check_branch
          %287 = sbr.rel (%p285) target = $region44
        $region43: #{tpu_custom_call.1} parent=27 // pred_region
          %p288 = scmp.lt.s32.totalorder %s17, 1
          %s289 = scalar_select %p288, %s17, 1
          %s290 = smul.addr %s289, 8
          %s291 = scalar_lea.vmem %s3, %s290
        $region44: #{tpu_custom_call.1} parent=27 // pred_fallthru
          _
        // Predicated region
        $region45: #{tpu_custom_call.1} parent=27 // pred_check
          %p292 = pneg %p141
        $region46: #{tpu_custom_call.1} parent=27 // pred_check_branch
          %294 = sbr.rel (%p292) target = $region48
        $region47: #{tpu_custom_call.1} parent=27 // pred_region
          %p295 = scmp.lt.s32.totalorder %s17, 1
          %s296 = scalar_select %p295, %s17, 1
          %s297 = smul.addr %s296, 8
          %s298 = scalar_lea.vmem %s4, %s297
        $region48: #{tpu_custom_call.1} parent=27 // pred_fallthru
          _
      $region28: #{tpu_custom_call.1} parent=5 // pred_fallthru
        _
      %p299 = scmp.le.s32.totalorder 1, %s17
      %p300 = scmp.lt.s32.totalorder %s17, 3
      %p301 = pnand %p299, %p300
      %p302 = pneg %p301
      // Predicated region
      $region49: #{tpu_custom_call.1} parent=5 // pred_check
        _
      $region50: #{tpu_custom_call.1} parent=5 // pred_check_branch
        %304 = sbr.rel (%p301) target = $region52
      $region51: #{tpu_custom_call.1} parent=5 // pred_region
        %s305 = ssub.s32 %s17, 1
        %p306 = scmp.lt.s32.totalorder %s22, 1
        %s307 = scalar_select %p306, %s22, 1
        %s308 = smul.addr %s307, 8
        %s309 = scalar_lea.vmem %s0, %s308
        %p310 = pneg %p43
        %p311 = pneg %p40
        %p312 = scmp.lt.s32.totalorder %s22, 1
        %s313 = scalar_select %p312, %s22, 1
        %s314 = smul.addr %s313, 8
        %s315 = scalar_lea.vmem %s1, %s314
        %p316 = pneg %p69
        %p317 = pneg %p66
        %p318 = scmp.lt.s32.totalorder %s22, 1
        %s319 = scalar_select %p318, %s22, 1
        %s320 = smul.addr %s319, 8
        %s321 = scalar_lea.vmem %s2, %s320
        %p322 = pneg %p95
        %p323 = pneg %p92
        %p324 = scmp.lt.s32.totalorder %s22, 1
        %s325 = scalar_select %p324, %s22, 1
        %s326 = smul.addr %s325, 8
        %s327 = scalar_lea.vmem %s3, %s326
        %p328 = pneg %p121
        %p329 = pneg %p118
        %p330 = scmp.lt.s32.totalorder %s22, 1
        %s331 = scalar_select %p330, %s22, 1
        %s332 = smul.addr %s331, 8
        %s333 = scalar_lea.vmem %s4, %s332
        %p334 = pneg %p147
        %p335 = pneg %p144
        %p336 = pneg %p168
        %p337 = pneg %p165
        %p338 = pneg %p189
        %p339 = pneg %p186
        %p340 = pneg %p210
        %p341 = pneg %p207
        %p342 = pneg %p236
        %p343 = pneg %p233
        %s344 = sand.u32 %s223, 1
        %s345 = scalar_lea.sflag [#allocation3], %s344
        %s346 = sand.u32 %s223, 1
        %s347 = smul.addr %s346, 8
        %s348 = scalar_lea.vmem [#allocation2], %s347
        %p349 = scmp.lt.s32.totalorder %s22, 1
        %s350 = scalar_select %p349, %s22, 1
        %s351 = smul.addr %s350, 8
        %s352 = scalar_lea.vmem %s0, %s351
        %p353 = scmp.lt.s32.totalorder %s22, 1
        %s354 = scalar_select %p353, %s22, 1
        %s355 = smul.addr %s354, 8
        %s356 = scalar_lea.vmem %s1, %s355
        %p357 = scmp.lt.s32.totalorder %s22, 1
        %s358 = scalar_select %p357, %s22, 1
        %s359 = smul.addr %s358, 8
        %s360 = scalar_lea.vmem %s2, %s359
        %p361 = scmp.lt.s32.totalorder %s22, 1
        %s362 = scalar_select %p361, %s22, 1
        %s363 = smul.addr %s362, 8
        %s364 = scalar_lea.vmem %s3, %s363
        %p365 = scmp.lt.s32.totalorder %s22, 1
        %s366 = scalar_select %p365, %s22, 1
        %s367 = smul.addr %s366, 8
        %s368 = scalar_lea.vmem %s4, %s367
        %v370 = vld [vmem:[%s352] sm:$0xff]
        %v371 = vld [vmem:[%s356] sm:$0xff]
        %v372 = vld [vmem:[%s360] sm:$0xff]
        %v373 = vld [vmem:[%s364] sm:$0xff]
        %v374 = vld [vmem:[%s368] sm:$0xff]
        %v375 = vld [vmem:[%s5] sm:$0xf]
        %v376 = vld [vmem:[%s5 + $0x4] sm:$0xf]
        %v377 = vld [vmem:[%s5 + $0x8] sm:$0xf]
        %v378 = vld [vmem:[%s5 + $0xc] sm:$0xf]
        %v379 = vld [vmem:[%s5 + $0x10] sm:$0xf]
        %v380 = vld [vmem:[%s5 + $0x14] sm:$0xf]
        %v381 = vld [vmem:[%s5 + $0x18] sm:$0xf]
        %v382 = vld [vmem:[%s5 + $0x1c] sm:$0xf]
        %v383 = vld [vmem:[%s5 + $0x20] sm:$0xf]
        %v384 = vld [vmem:[%s5 + $0x24] sm:$0xf]
        %v385 = vld [vmem:[%s5 + $0x28] sm:$0xf]
        %v386 = vld [vmem:[%s5 + $0x2c] sm:$0xf]
        %v387 = vld [vmem:[%s5 + $0x30] sm:$0xf]
        %v388 = vld [vmem:[%s5 + $0x34] sm:$0xf]
        %v389 = vld [vmem:[%s5 + $0x38] sm:$0xf]
        %v390 = vld [vmem:[%s5 + $0x3c] sm:$0xf]
        %v391 = vld [vmem:[%s5 + $0x40] sm:$0xf]
        %v392 = vld [vmem:[%s5 + $0x44] sm:$0xf]
        %v393 = vld [vmem:[%s5 + $0x48] sm:$0xf]
        %v394 = vld [vmem:[%s5 + $0x4c] sm:$0xf]
        %v395 = vld [vmem:[%s5 + $0x50] sm:$0xf]
        %v396 = vld [vmem:[%s5 + $0x54] sm:$0xf]
        %v397 = vld [vmem:[%s5 + $0x58] sm:$0xf]
        %v398 = vld [vmem:[%s5 + $0x5c] sm:$0xf]
        %v399 = vld [vmem:[%s6] sm:$0xf]
        %v400 = vld [vmem:[%s6 + $0x4] sm:$0xf]
        %v401 = vld [vmem:[%s6 + $0x8] sm:$0xf]
        %v402 = vld [vmem:[%s6 + $0xc] sm:$0xf]
        %v403 = vld [vmem:[%s7] sm:$0xff]
        %v404 = vld [vmem:[%s7 + $0x8] sm:$0x3]
        %v405 = vlaneseq
        %v406 = vand.u32 %v405, 127
        %v407 = vlaneseq
        %v408 = vshrl.u32 %v407, 7
        %v409 = vmul.u32 %v408, 4
        %vm410 = vcmp.ge.s32.totalorder %v406, %v409
        %v411 = vadd.s32 %v408, 1
        %v412 = vmul.u32 %v411, 4
        %vm413 = vcmp.lt.s32.totalorder %v406, %v412
        %vm414 = vmand %vm410, %vm413
        %v415 = vsel %vm414, 1, 0
        %v416 = vcvt.s32.f32 %v415
        %v417 = vpack.c.bf16 %v416, %v416
        %v418 = vmul.f32 %v370, 0.17677669
        %v419 = vpack.c.bf16 %v418, %v418
        %v422 = vunpack.c.l.s4 1966171168
        %v423 = vunpack.c.0.s8 %v422
        %v424 = vlaneseq
        %v425 = vshrl.u32 %v424, 7
        %v426 = vsub.s32 %v423, %v425
        %v427 = vrot.slane %v417, %v426
        %v428 = vcombine.high %v427, %v427
        %v430 = vunpack.c.l.s4 1966171168
        %v431 = vunpack.c.0.s8 %v430
        %v432 = vlaneseq
        %v433 = vshrl.u32 %v432, 7
        %v434 = vsub.s32 %v431, %v433
        %v435 = vrot.slane %v427, %v434
        %v437 = vunpack.c.l.s4 1966171168
        %v438 = vunpack.c.0.s8 %v437
        %v439 = vlaneseq
        %v440 = vshrl.u32 %v439, 7
        %v441 = vsub.s32 %v438, %v440
        %v442 = vrot.slane %v428, %v441
        %v443 = vcombine.high %v435, %v435
        %v444 = vcombine.high %v442, %v442
        %v445 = vunpack.i.l.s16 %v435
        %v446 = vunpack.i.h.s16 %v435
        %v447 = vunpack.i.l.s16 %v442
        %v448 = vunpack.i.h.s16 %v442
        %v449 = vunpack.i.l.s16 %v443
        %v450 = vunpack.i.h.s16 %v443
        %v451 = vunpack.i.l.s16 %v444
        %v452 = vunpack.i.h.s16 %v444
        %v453 = vpack.i.b16 %v445, %v445
        %v454 = vpack.i.b16 %v446, %v446
        %v455 = vpack.i.b16 %v447, %v447
        %v456 = vpack.i.b16 %v448, %v448
        %v457 = vpack.i.b16 %v449, %v449
        %v458 = vpack.i.b16 %v450, %v450
        %v459 = vpack.i.b16 %v451, %v451
        %v460 = vpack.i.b16 %v452, %v452
        %v461 = vlaneseq
        %v462 = vshrl.u32 %v461, 7
        %v463 = vsub.s32 0, %v462
        %v464 = vrot.slane %v453, %v463
        %v465 = vlaneseq
        %v466 = vshrl.u32 %v465, 7
        %v467 = vsub.s32 0, %v466
        %v468 = vrot.slane %v454, %v467
        %v469 = vlaneseq
        %v470 = vshrl.u32 %v469, 7
        %v471 = vsub.s32 0, %v470
        %v472 = vrot.slane %v455, %v471
        %v473 = vlaneseq
        %v474 = vshrl.u32 %v473, 7
        %v475 = vsub.s32 0, %v474
        %v476 = vrot.slane %v456, %v475
        %v477 = vlaneseq
        %v478 = vshrl.u32 %v477, 7
        %v479 = vsub.s32 0, %v478
        %v480 = vrot.slane %v457, %v479
        %v481 = vlaneseq
        %v482 = vshrl.u32 %v481, 7
        %v483 = vsub.s32 0, %v482
        %v484 = vrot.slane %v458, %v483
        %v485 = vlaneseq
        %v486 = vshrl.u32 %v485, 7
        %v487 = vsub.s32 0, %v486
        %v488 = vrot.slane %v459, %v487
        %v489 = vlaneseq
        %v490 = vshrl.u32 %v489, 7
        %v491 = vsub.s32 0, %v490
        %v492 = vrot.slane %v460, %v491
        %v494 = vpack.i.b16 %v464, %v464
        %v496 = vlaneseq
        %v497 = vshrl.u32 %v496, 7
        %v498 = vsub.s32 0, %v497
        %v499 = vrot.slane %v494, %v498
        %v501 = vpack.i.b16 %v468, %v468
        %v503 = vlaneseq
        %v504 = vshrl.u32 %v503, 7
        %v505 = vsub.s32 0, %v504
        %v506 = vrot.slane %v501, %v505
        %v508 = vpack.i.b16 %v472, %v472
        %v510 = vlaneseq
        %v511 = vshrl.u32 %v510, 7
        %v512 = vsub.s32 0, %v511
        %v513 = vrot.slane %v508, %v512
        %v515 = vpack.i.b16 %v476, %v476
        %v517 = vlaneseq
        %v518 = vshrl.u32 %v517, 7
        %v519 = vsub.s32 0, %v518
        %v520 = vrot.slane %v515, %v519
        %v522 = vpack.i.b16 %v480, %v480
        %v524 = vlaneseq
        %v525 = vshrl.u32 %v524, 7
        %v526 = vsub.s32 0, %v525
        %v527 = vrot.slane %v522, %v526
        %v529 = vpack.i.b16 %v484, %v484
        %v531 = vlaneseq
        %v532 = vshrl.u32 %v531, 7
        %v533 = vsub.s32 0, %v532
        %v534 = vrot.slane %v529, %v533
        %v536 = vpack.i.b16 %v488, %v488
        %v538 = vlaneseq
        %v539 = vshrl.u32 %v538, 7
        %v540 = vsub.s32 0, %v539
        %v541 = vrot.slane %v536, %v540
        %v543 = vpack.i.b16 %v492, %v492
        %v545 = vlaneseq
        %v546 = vshrl.u32 %v545, 7
        %v547 = vsub.s32 0, %v546
        %v548 = vrot.slane %v543, %v547
        %v549 = vmul.bf16 %v419, %v499
        %v550 = vmul.bf16 %v419, %v506
        %v551 = vmul.bf16 %v419, %v513
        %v552 = vmul.bf16 %v419, %v520
        %v553 = vmul.bf16 %v419, %v527
        %v554 = vmul.bf16 %v419, %v534
        %v555 = vmul.bf16 %v419, %v541
        %v556 = vmul.bf16 %v419, %v548
        %v557 = vpack.c.bf16 %v370, %v370
        %v566 = vunpack.c.l.b16 %v549
        %v567 = vunpack.c.l.b16 %v550
        %v568 = vunpack.c.l.b16 %v551
        %v569 = vunpack.c.l.b16 %v552
        %v570 = vunpack.c.l.b16 %v553
        %v571 = vunpack.c.l.b16 %v554
        %v572 = vunpack.c.l.b16 %v555
        %v573 = vunpack.c.l.b16 %v556
        %v574 = vpack.c.b16 %v567, %v566
        %v575 = vpack.c.b16 %v569, %v568
        %v576 = vpack.c.b16 %v571, %v570
        %v577 = vpack.c.b16 %v573, %v572
        %vm578 = vcmask 261120
        %v580 = vsel %vm578, %v574, 0
        %v583 = vsel %vm578, %v575, 0
        %v586 = vsel %vm578, %v576, 0
        %v589 = vsel %vm578, %v577, 0
        %v592 = vsel %vm578, %v557, 0
        %594 = vmatprep.subr.bf16.mxu0 0
        %595 = vmatpush1.bf16.xpose.msra.mxu0 %v592
        %596 = vmatprep.subr.bf16.mxu0 0
        %597 = vmatpush1.bf16.xpose.msra.mxu0 0
        %598 = vmatprep.subr.bf16.mxu0 0
        %599 = vmatpush1.bf16.xpose.msra.mxu0 0
        %600 = vmatprep.subr.bf16.mxu0 0
        %601 = vmatpush1.bf16.xpose.msra.mxu0 0
        %602 = vmatprep.subr.bf16.mxu0 0
        %603 = vmatpush1.bf16.xpose.msra.mxu0 0
        %604 = vmatprep.subr.bf16.mxu0 0
        %605 = vmatpush1.bf16.xpose.msra.mxu0 0
        %606 = vmatprep.subr.bf16.mxu0 0
        %607 = vmatpush1.bf16.xpose.msra.mxu0 0
        %608 = vmatprep.subr.bf16.mxu0 0
        %609 = vmatpush1.bf16.xpose.msra.mxu0 0
        %610 = vmatprep.subr.bf16.mxu0 0
        %611 = vmatpush1.bf16.xpose.msra.mxu0 0
        %612 = vmatprep.subr.bf16.mxu0 0
        %613 = vmatpush1.bf16.xpose.msra.mxu0 0
        %614 = vmatprep.subr.bf16.mxu0 0
        %615 = vmatpush1.bf16.xpose.msra.mxu0 0
        %616 = vmatprep.subr.bf16.mxu0 0
        %617 = vmatpush1.bf16.xpose.msra.mxu0 0
        %618 = vmatprep.subr.bf16.mxu0 0
        %619 = vmatpush1.bf16.xpose.msra.mxu0 0
        %620 = vmatprep.subr.bf16.mxu0 0
        %621 = vmatpush1.bf16.xpose.msra.mxu0 0
        %622 = vmatprep.subr.bf16.mxu0 0
        %623 = vmatpush1.bf16.xpose.msra.mxu0 0
        %624 = vmatprep.subr.bf16.mxu0 0
        %625 = vmatpush1.bf16.xpose.msra.mxu0 0
        %626 = vmatprep.mubr.bf16.mxu0 0
        %627 = vmatmul.mubr.bf16.gmra.mrb[0].mxu0 %v580
        %v628 = vpop.f32.mrb[0].mxu0
        %v629 = vadd.f32 0.0, %v628
        %v630 = vpop.f32.mrb[0].mxu0
        %v631 = vpop.f32.mrb[0].mxu0
        %v632 = vadd.f32 0.0, %v631
        %v633 = vpop.f32.mrb[0].mxu0
        %634 = vmatprep.mubr.bf16.mxu0 0
        %635 = vmatmul.mubr.bf16.gmra.mrb[0].mxu0 %v583
        %v636 = vpop.f32.mrb[0].mxu0
        %v637 = vadd.f32 0.0, %v636
        %v638 = vpop.f32.mrb[0].mxu0
        %v639 = vpop.f32.mrb[0].mxu0
        %v640 = vadd.f32 0.0, %v639
        %v641 = vpop.f32.mrb[0].mxu0
        %642 = vmatprep.mubr.bf16.mxu0 0
        %643 = vmatmul.mubr.bf16.gmra.mrb[0].mxu0 %v586
        %v644 = vpop.f32.mrb[0].mxu0
        %v645 = vadd.f32 0.0, %v644
        %v646 = vpop.f32.mrb[0].mxu0
        %v647 = vpop.f32.mrb[0].mxu0
        %v648 = vadd.f32 0.0, %v647
        %v649 = vpop.f32.mrb[0].mxu0
        %650 = vmatprep.mubr.bf16.mxu0 0
        %651 = vmatmul.mubr.bf16.gmra.mrb[0].mxu0 %v589
        %v652 = vpop.f32.mrb[0].mxu0
        %v653 = vadd.f32 0.0, %v652
        %v654 = vpop.f32.mrb[0].mxu0
        %v655 = vpop.f32.mrb[0].mxu0
        %v656 = vadd.f32 0.0, %v655
        %v657 = vpop.f32.mrb[0].mxu0
        %658 = vdwg.mxu0
        %vm659 = vcmp.eq.f32.partialorder %v373, 0.0
        %v660 = vsel %vm659, -1e+20, %v629
        %v661 = vsel %vm659, -1e+20, %v632
        %v662 = vsel %vm659, -1e+20, %v637
        %v663 = vsel %vm659, -1e+20, %v640
        %v664 = vsel %vm659, -1e+20, %v645
        %v665 = vsel %vm659, -1e+20, %v648
        %v666 = vsel %vm659, -1e+20, %v653
        %v667 = vsel %vm659, -1e+20, %v656
        %vm668 = vcmask 64512
        %v669 = vsel %vm668, %v660, -inf
        %670 = vmax.xlane.f32.xlu0 %v669
        %v671 = vpop.xlane.xlu0 %670
        %v672 = vsel %vm668, %v661, -inf
        %673 = vmax.xlane.f32.xlu0 %v672
        %v674 = vpop.xlane.xlu0 %673
        %v675 = vsel %vm668, %v662, -inf
        %676 = vmax.xlane.f32.xlu0 %v675
        %v677 = vpop.xlane.xlu0 %676
        %v678 = vsel %vm668, %v663, -inf
        %679 = vmax.xlane.f32.xlu0 %v678
        %v680 = vpop.xlane.xlu0 %679
        %v681 = vsel %vm668, %v664, -inf
        %682 = vmax.xlane.f32.xlu0 %v681
        %v683 = vpop.xlane.xlu0 %682
        %v684 = vsel %vm668, %v665, -inf
        %685 = vmax.xlane.f32.xlu0 %v684
        %v686 = vpop.xlane.xlu0 %685
        %v687 = vsel %vm668, %v666, -inf
        %688 = vmax.xlane.f32.xlu0 %v687
        %v689 = vpop.xlane.xlu0 %688
        %v690 = vsel %vm668, %v667, -inf
        %691 = vmax.xlane.f32.xlu0 %v690
        %v692 = vpop.xlane.xlu0 %691
        %v693 = vsub.f32 %v660, %v671
        %v694 = vsub.f32 %v661, %v674
        %v695 = vsub.f32 %v662, %v677
        %v696 = vsub.f32 %v663, %v680
        %v697 = vsub.f32 %v664, %v683
        %v698 = vsub.f32 %v665, %v686
        %v699 = vsub.f32 %v666, %v689
        %v700 = vsub.f32 %v667, %v692
        %v701 = vmul.f32 %v693, 1.442695
        %v702 = vpow.pop %v701
        %v703 = vmul.f32 %v694, 1.442695
        %v704 = vpow.pop %v703
        %v705 = vmul.f32 %v695, 1.442695
        %v706 = vpow.pop %v705
        %v707 = vmul.f32 %v696, 1.442695
        %v708 = vpow.pop %v707
        %v709 = vmul.f32 %v697, 1.442695
        %v710 = vpow.pop %v709
        %v711 = vmul.f32 %v698, 1.442695
        %v712 = vpow.pop %v711
        %v713 = vmul.f32 %v699, 1.442695
        %v714 = vpow.pop %v713
        %v715 = vmul.f32 %v700, 1.442695
        %v716 = vpow.pop %v715
        %v717 = vsel %vm668, %v702, 0.0
        %718 = vadd.xlane.f32.xlu0 %v717
        %v719 = vpop.xlane.xlu0 %718
        %v720 = vsel %vm668, %v704, 0.0
        %721 = vadd.xlane.f32.xlu0 %v720
        %v722 = vpop.xlane.xlu0 %721
        %v723 = vsel %vm668, %v706, 0.0
        %724 = vadd.xlane.f32.xlu0 %v723
        %v725 = vpop.xlane.xlu0 %724
        %v726 = vsel %vm668, %v708, 0.0
        %727 = vadd.xlane.f32.xlu0 %v726
        %v728 = vpop.xlane.xlu0 %727
        %v729 = vsel %vm668, %v710, 0.0
        %730 = vadd.xlane.f32.xlu0 %v729
        %v731 = vpop.xlane.xlu0 %730
        %v732 = vsel %vm668, %v712, 0.0
        %733 = vadd.xlane.f32.xlu0 %v732
        %v734 = vpop.xlane.xlu0 %733
        %v735 = vsel %vm668, %v714, 0.0
        %736 = vadd.xlane.f32.xlu0 %v735
        %v737 = vpop.xlane.xlu0 %736
        %v738 = vsel %vm668, %v716, 0.0
        %739 = vadd.xlane.f32.xlu0 %v738
        %v740 = vpop.xlane.xlu0 %739
        %v741 = vmax.f32 %v719, 1e-30
        %v742 = vmax.f32 %v722, 1e-30
        %v743 = vmax.f32 %v725, 1e-30
        %v744 = vmax.f32 %v728, 1e-30
        %v745 = vmax.f32 %v731, 1e-30
        %v746 = vmax.f32 %v734, 1e-30
        %v747 = vmax.f32 %v737, 1e-30
        %v748 = vmax.f32 %v740, 1e-30
        %v749 = vrcp.pop %v741
        %v750 = vrcp.pop %v742
        %v751 = vrcp.pop %v743
        %v752 = vrcp.pop %v744
        %v753 = vrcp.pop %v745
        %v754 = vrcp.pop %v746
        %v755 = vrcp.pop %v747
        %v756 = vrcp.pop %v748
        %v757 = vmul.f32 %v702, %v749
        %v758 = vmul.f32 %v704, %v750
        %v759 = vmul.f32 %v706, %v751
        %v760 = vmul.f32 %v708, %v752
        %v761 = vmul.f32 %v710, %v753
        %v762 = vmul.f32 %v712, %v754
        %v763 = vmul.f32 %v714, %v755
        %v764 = vmul.f32 %v716, %v756
        %v765 = vpack.c.bf16 %v758, %v757
        %v766 = vpack.c.bf16 %v760, %v759
        %v767 = vpack.c.bf16 %v762, %v761
        %v768 = vpack.c.bf16 %v764, %v763
        %v770 = vsel %vm668, %v765, 0
        %v773 = vsel %vm668, %v766, 0
        %v776 = vsel %vm668, %v767, 0
        %v779 = vsel %vm668, %v768, 0
        %vm781 = vcmask 1043456
        %v782 = vsel %vm781, %v557, 0
        %784 = vmatprep.subr.bf16.mxu0 0
        %785 = vmatpush1.bf16.msra.mxu0 %v782
        %786 = vmatprep.subr.bf16.mxu0 0
        %787 = vmatpush1.bf16.msra.mxu0 0
        %788 = vmatprep.subr.bf16.mxu0 0
        %789 = vmatpush1.bf16.msra.mxu0 0
        %790 = vmatprep.subr.bf16.mxu0 0
        %791 = vmatpush1.bf16.msra.mxu0 0
        %792 = vmatprep.subr.bf16.mxu0 0
        %793 = vmatpush1.bf16.msra.mxu0 0
        %794 = vmatprep.subr.bf16.mxu0 0
        %795 = vmatpush1.bf16.msra.mxu0 0
        %796 = vmatprep.subr.bf16.mxu0 0
        %797 = vmatpush1.bf16.msra.mxu0 0
        %798 = vmatprep.subr.bf16.mxu0 0
        %799 = vmatpush1.bf16.msra.mxu0 0
        %800 = vmatprep.subr.bf16.mxu0 0
        %801 = vmatpush1.bf16.msra.mxu0 0
        %802 = vmatprep.subr.bf16.mxu0 0
        %803 = vmatpush1.bf16.msra.mxu0 0
        %804 = vmatprep.subr.bf16.mxu0 0
        %805 = vmatpush1.bf16.msra.mxu0 0
        %806 = vmatprep.subr.bf16.mxu0 0
        %807 = vmatpush1.bf16.msra.mxu0 0
        %808 = vmatprep.subr.bf16.mxu0 0
        %809 = vmatpush1.bf16.msra.mxu0 0
        %810 = vmatprep.subr.bf16.mxu0 0
        %811 = vmatpush1.bf16.msra.mxu0 0
        %812 = vmatprep.subr.bf16.mxu0 0
        %813 = vmatpush1.bf16.msra.mxu0 0
        %814 = vmatprep.subr.bf16.mxu0 0
        %815 = vmatpush1.bf16.msra.mxu0 0
        %816 = vmatprep.mubr.bf16.mxu0 0
        %817 = vmatmul.mubr.bf16.gmra.mrb[0].mxu0 %v770
        %v818 = vpop.f32.mrb[0].mxu0
        %v819 = vadd.f32 0.0, %v818
        %v820 = vpop.f32.mrb[0].mxu0
        %v821 = vpop.f32.mrb[0].mxu0
        %v822 = vadd.f32 0.0, %v821
        %v823 = vpop.f32.mrb[0].mxu0
        %824 = vmatprep.mubr.bf16.mxu0 0
        %825 = vmatmul.mubr.bf16.gmra.mrb[0].mxu0 %v773
        %v826 = vpop.f32.mrb[0].mxu0
        %v827 = vadd.f32 0.0, %v826
        %v828 = vpop.f32.mrb[0].mxu0
        %v829 = vpop.f32.mrb[0].mxu0
        %v830 = vadd.f32 0.0, %v829
        %v831 = vpop.f32.mrb[0].mxu0
        %832 = vmatprep.mubr.bf16.mxu0 0
        %833 = vmatmul.mubr.bf16.gmra.mrb[0].mxu0 %v776
        %v834 = vpop.f32.mrb[0].mxu0
        %v835 = vadd.f32 0.0, %v834
        %v836 = vpop.f32.mrb[0].mxu0
        %v837 = vpop.f32.mrb[0].mxu0
        %v838 = vadd.f32 0.0, %v837
        %v839 = vpop.f32.mrb[0].mxu0
        %840 = vmatprep.mubr.bf16.mxu0 0
        %841 = vmatmul.mubr.bf16.gmra.mrb[0].mxu0 %v779
        %v842 = vpop.f32.mrb[0].mxu0
        %v843 = vadd.f32 0.0, %v842
        %v844 = vpop.f32.mrb[0].mxu0
        %v845 = vpop.f32.mrb[0].mxu0
        %v846 = vadd.f32 0.0, %v845
        %v847 = vpop.f32.mrb[0].mxu0
        %848 = vdwg.mxu0
        %v850 = vcombine.high %v416, %v416
        %v852 = vunpack.c.l.s4 1966171168
        %v853 = vunpack.c.0.s8 %v852
        %v854 = vlaneseq
        %v855 = vshrl.u32 %v854, 7
        %v856 = vsub.s32 %v853, %v855
        %v857 = vrot.slane %v416, %v856
        %v859 = vunpack.c.l.s4 1966171168
        %v860 = vunpack.c.0.s8 %v859
        %v861 = vlaneseq
        %v862 = vshrl.u32 %v861, 7
        %v863 = vsub.s32 %v860, %v862
        %v864 = vrot.slane %v850, %v863
        %v865 = vcombine.high %v857, %v857
        %v866 = vcombine.high %v864, %v864
        %v868 = vunpack.c.l.s4 1966171168
        %v869 = vunpack.c.0.s8 %v868
        %v870 = vlaneseq
        %v871 = vshrl.u32 %v870, 7
        %v872 = vsub.s32 %v869, %v871
        %v873 = vrot.slane %v857, %v872
        %v875 = vunpack.c.l.s4 1966171168
        %v876 = vunpack.c.0.s8 %v875
        %v877 = vlaneseq
        %v878 = vshrl.u32 %v877, 7
        %v879 = vsub.s32 %v876, %v878
        %v880 = vrot.slane %v864, %v879
        %v882 = vunpack.c.l.s4 1966171168
        %v883 = vunpack.c.0.s8 %v882
        %v884 = vlaneseq
        %v885 = vshrl.u32 %v884, 7
        %v886 = vsub.s32 %v883, %v885
        %v887 = vrot.slane %v865, %v886
        %v889 = vunpack.c.l.s4 1966171168
        %v890 = vunpack.c.0.s8 %v889
        %v891 = vlaneseq
        %v892 = vshrl.u32 %v891, 7
        %v893 = vsub.s32 %v890, %v892
        %v894 = vrot.slane %v866, %v893
        %v895 = vcombine.high %v873, %v873
        %v896 = vcombine.high %v880, %v880
        %v897 = vcombine.high %v887, %v887
        %v898 = vcombine.high %v894, %v894
        %v899 = vlaneseq
        %v900 = vshrl.u32 %v899, 7
        %v901 = vsub.s32 0, %v900
        %v902 = vrot.slane %v873, %v901
        %v903 = vlaneseq
        %v904 = vshrl.u32 %v903, 7
        %v905 = vsub.s32 0, %v904
        %v906 = vrot.slane %v887, %v905
        %v907 = vlaneseq
        %v908 = vshrl.u32 %v907, 7
        %v909 = vsub.s32 0, %v908
        %v910 = vrot.slane %v895, %v909
        %v911 = vlaneseq
        %v912 = vshrl.u32 %v911, 7
        %v913 = vsub.s32 0, %v912
        %v914 = vrot.slane %v897, %v913
        %v915 = vlaneseq
        %v916 = vshrl.u32 %v915, 7
        %v917 = vsub.s32 0, %v916
        %v918 = vrot.slane %v880, %v917
        %v919 = vlaneseq
        %v920 = vshrl.u32 %v919, 7
        %v921 = vsub.s32 0, %v920
        %v922 = vrot.slane %v894, %v921
        %v923 = vlaneseq
        %v924 = vshrl.u32 %v923, 7
        %v925 = vsub.s32 0, %v924
        %v926 = vrot.slane %v896, %v925
        %v927 = vlaneseq
        %v928 = vshrl.u32 %v927, 7
        %v929 = vsub.s32 0, %v928
        %v930 = vrot.slane %v898, %v929
        %v939 = vmul.f32 %v819, %v902
        %v940 = vmul.f32 %v822, %v906
        %v941 = vmul.f32 %v827, %v910
        %v942 = vmul.f32 %v830, %v914
        %v943 = vmul.f32 %v835, %v918
        %v944 = vmul.f32 %v838, %v922
        %v945 = vmul.f32 %v843, %v926
        %v946 = vmul.f32 %v846, %v930
        %v947 = vsel %vm578, %v939, 0.0
        %v948 = vsel %vm578, %v940, 0.0
        %v949 = vadd.f32 %v947, %v948
        %v950 = vsel %vm578, %v941, 0.0
        %v951 = vadd.f32 %v949, %v950
        %v952 = vsel %vm578, %v942, 0.0
        %v953 = vadd.f32 %v951, %v952
        %v954 = vsel %vm578, %v943, 0.0
        %v955 = vadd.f32 %v953, %v954
        %v956 = vsel %vm578, %v944, 0.0
        %v957 = vadd.f32 %v955, %v956
        %v958 = vsel %vm578, %v945, 0.0
        %v959 = vadd.f32 %v957, %v958
        %v960 = vsel %vm578, %v946, 0.0
        %v961 = vadd.f32 %v959, %v960
        %v962 = vpack.c.bf16 %v961, %v961
        %v963 = vlaneseq
        %v964 = vshrl.u32 %v963, 7
        %v965 = vsub.s32 0, %v964
        %v966 = vrot.slane %v403, %v965
        %v971 = vunpack.c.l.b16 %v375
        %v972 = vunpack.c.l.b16 %v376
        %v973 = vunpack.c.l.b16 %v377
        %v974 = vunpack.c.l.b16 %v378
        %v975 = vpack.c.b16 %v972, %v971
        %v976 = vpack.c.b16 %v974, %v973
        %v980 = vsel %vm578, %v962, 0
        %982 = vmatprep.subr.bf16.mxu0 0
        %983 = vmatpush1.bf16.msra.mxu0 %v975
        %984 = vmatprep.subr.bf16.mxu0 0
        %985 = vmatpush1.bf16.msra.mxu0 %v976
        %986 = vmatprep.subr.bf16.mxu0 0
        %987 = vmatpush1.bf16.msra.mxu0 0
        %988 = vmatprep.subr.bf16.mxu0 0
        %989 = vmatpush1.bf16.msra.mxu0 0
        %990 = vmatprep.subr.bf16.mxu0 0
        %991 = vmatpush1.bf16.msra.mxu0 0
        %992 = vmatprep.subr.bf16.mxu0 0
        %993 = vmatpush1.bf16.msra.mxu0 0
        %994 = vmatprep.subr.bf16.mxu0 0
        %995 = vmatpush1.bf16.msra.mxu0 0
        %996 = vmatprep.subr.bf16.mxu0 0
        %997 = vmatpush1.bf16.msra.mxu0 0
        %998 = vmatprep.subr.bf16.mxu0 0
        %999 = vmatpush1.bf16.msra.mxu0 0
        %1000 = vmatprep.subr.bf16.mxu0 0
        %1001 = vmatpush1.bf16.msra.mxu0 0
        %1002 = vmatprep.subr.bf16.mxu0 0
        %1003 = vmatpush1.bf16.msra.mxu0 0
        %1004 = vmatprep.subr.bf16.mxu0 0
        %1005 = vmatpush1.bf16.msra.mxu0 0
        %1006 = vmatprep.subr.bf16.mxu0 0
        %1007 = vmatpush1.bf16.msra.mxu0 0
        %1008 = vmatprep.subr.bf16.mxu0 0
        %1009 = vmatpush1.bf16.msra.mxu0 0
        %1010 = vmatprep.subr.bf16.mxu0 0
        %1011 = vmatpush1.bf16.msra.mxu0 0
        %1012 = vmatprep.subr.bf16.mxu0 0
        %1013 = vmatpush1.bf16.msra.mxu0 0
        %1014 = vmatprep.mubr.bf16.mxu0 0
        %1015 = vmatmul.mubr.bf16.gmra.mrb[0].mxu0 %v980
        %v1016 = vpop.f32.mrb[0].mxu0
        %v1017 = vadd.f32 %v966, %v1016
        %v1018 = vpop.f32.mrb[0].mxu0
        %v1019 = vpop.f32.mrb[0].mxu0
        %v1020 = vpop.f32.mrb[0].mxu0
        %1021 = vdwg.mxu0
        %v1022 = vadd.f32 %v1017, %v370
        %v1023 = vsel %vm578, %v1022, 0.0
        %1024 = vadd.xlane.f32.xlu0 %v1023
        %v1025 = vpop.xlane.xlu0 %1024
        %v1026 = vrcp.pop 32.0
        %v1027 = vmul.f32 %v1025, %v1026
        %v1028 = vsub.f32 %v1022, %v1027
        %v1029 = vmul.f32 %v1028, %v1028
        %v1030 = vsel %vm578, %v1029, 0.0
        %1031 = vadd.xlane.f32.xlu0 %v1030
        %v1032 = vpop.xlane.xlu0 %1031
        %v1033 = vmul.f32 %v1032, %v1026
        %v1034 = vadd.f32 %v1033, 1e-05
        %v1035 = vrsqrt.pop %v1034
        %v1036 = vmul.f32 %v1028, %v1035
        %v1037 = vlaneseq
        %v1038 = vshrl.u32 %v1037, 7
        %v1039 = vsub.s32 1, %v1038
        %v1040 = vrot.slane %v403, %v1039
        %v1041 = vmul.f32 %v1036, %v1040
        %v1042 = vlaneseq
        %v1043 = vshrl.u32 %v1042, 7
        %v1044 = vsub.s32 2, %v1043
        %v1045 = vrot.slane %v403, %v1044
        %v1046 = vadd.f32 %v1041, %v1045
        %v1047 = vmul.f32 %v1046, 0.17677669
        %v1048 = vpack.c.bf16 %v1047, %v1047
        %v1049 = vmul.bf16 %v1048, %v499
        %v1050 = vmul.bf16 %v1048, %v506
        %v1051 = vmul.bf16 %v1048, %v513
        %v1052 = vmul.bf16 %v1048, %v520
        %v1053 = vmul.bf16 %v1048, %v527
        %v1054 = vmul.bf16 %v1048, %v534
        %v1055 = vmul.bf16 %v1048, %v541
        %v1056 = vmul.bf16 %v1048, %v548
        %v1057 = vpack.c.bf16 %v371, %v371
        %v1066 = vunpack.c.l.b16 %v1049
        %v1067 = vunpack.c.l.b16 %v1050
        %v1068 = vunpack.c.l.b16 %v1051
        %v1069 = vunpack.c.l.b16 %v1052
        %v1070 = vunpack.c.l.b16 %v1053
        %v1071 = vunpack.c.l.b16 %v1054
        %v1072 = vunpack.c.l.b16 %v1055
        %v1073 = vunpack.c.l.b16 %v1056
        %v1074 = vpack.c.b16 %v1067, %v1066
        %v1075 = vpack.c.b16 %v1069, %v1068
        %v1076 = vpack.c.b16 %v1071, %v1070
        %v1077 = vpack.c.b16 %v1073, %v1072
        %v1079 = vsel %vm578, %v1074, 0
        %v1082 = vsel %vm578, %v1075, 0
        %v1085 = vsel %vm578, %v1076, 0
        %v1088 = vsel %vm578, %v1077, 0
        %v1091 = vsel %vm578, %v1057, 0
        %1093 = vmatprep.subr.bf16.mxu0 0
        %1094 = vmatpush1.bf16.xpose.msra.mxu0 %v1091
        %1095 = vmatprep.subr.bf16.mxu0 0
        %1096 = vmatpush1.bf16.xpose.msra.mxu0 0
        %1097 = vmatprep.subr.bf16.mxu0 0
        %1098 = vmatpush1.bf16.xpose.msra.mxu0 0
        %1099 = vmatprep.subr.bf16.mxu0 0
        %1100 = vmatpush1.bf16.xpose.msra.mxu0 0
        %1101 = vmatprep.subr.bf16.mxu0 0
        %1102 = vmatpush1.bf16.xpose.msra.mxu0 0
        %1103 = vmatprep.subr.bf16.mxu0 0
        %1104 = vmatpush1.bf16.xpose.msra.mxu0 0
        %1105 = vmatprep.subr.bf16.mxu0 0
        %1106 = vmatpush1.bf16.xpose.msra.mxu0 0
        %1107 = vmatprep.subr.bf16.mxu0 0
        %1108 = vmatpush1.bf16.xpose.msra.mxu0 0
        %1109 = vmatprep.subr.bf16.mxu0 0
        %1110 = vmatpush1.bf16.xpose.msra.mxu0 0
        %1111 = vmatprep.subr.bf16.mxu0 0
        %1112 = vmatpush1.bf16.xpose.msra.mxu0 0
        %1113 = vmatprep.subr.bf16.mxu0 0
        %1114 = vmatpush1.bf16.xpose.msra.mxu0 0
        %1115 = vmatprep.subr.bf16.mxu0 0
        %1116 = vmatpush1.bf16.xpose.msra.mxu0 0
        %1117 = vmatprep.subr.bf16.mxu0 0
        %1118 = vmatpush1.bf16.xpose.msra.mxu0 0
        %1119 = vmatprep.subr.bf16.mxu0 0
        %1120 = vmatpush1.bf16.xpose.msra.mxu0 0
        %1121 = vmatprep.subr.bf16.mxu0 0
        %1122 = vmatpush1.bf16.xpose.msra.mxu0 0
        %1123 = vmatprep.subr.bf16.mxu0 0
        %1124 = vmatpush1.bf16.xpose.msra.mxu0 0
        %1125 = vmatprep.mubr.bf16.mxu0 0
        %1126 = vmatmul.mubr.bf16.gmra.mrb[0].mxu0 %v1079
        %v1127 = vpop.f32.mrb[0].mxu0
        %v1128 = vadd.f32 0.0, %v1127
        %v1129 = vpop.f32.mrb[0].mxu0
        %v1130 = vpop.f32.mrb[0].mxu0
        %v1131 = vadd.f32 0.0, %v1130
        %v1132 = vpop.f32.mrb[0].mxu0
        %1133 = vmatprep.mubr.bf16.mxu0 0
        %1134 = vmatmul.mubr.bf16.gmra.mrb[0].mxu0 %v1082
        %v1135 = vpop.f32.mrb[0].mxu0
        %v1136 = vadd.f32 0.0, %v1135
        %v1137 = vpop.f32.mrb[0].mxu0
        %v1138 = vpop.f32.mrb[0].mxu0
        %v1139 = vadd.f32 0.0, %v1138
        %v1140 = vpop.f32.mrb[0].mxu0
        %1141 = vmatprep.mubr.bf16.mxu0 0
        %1142 = vmatmul.mubr.bf16.gmra.mrb[0].mxu0 %v1085
        %v1143 = vpop.f32.mrb[0].mxu0
        %v1144 = vadd.f32 0.0, %v1143
        %v1145 = vpop.f32.mrb[0].mxu0
        %v1146 = vpop.f32.mrb[0].mxu0
        %v1147 = vadd.f32 0.0, %v1146
        %v1148 = vpop.f32.mrb[0].mxu0
        %1149 = vmatprep.mubr.bf16.mxu0 0
        %1150 = vmatmul.mubr.bf16.gmra.mrb[0].mxu0 %v1088
        %v1151 = vpop.f32.mrb[0].mxu0
        %v1152 = vadd.f32 0.0, %v1151
        %v1153 = vpop.f32.mrb[0].mxu0
        %v1154 = vpop.f32.mrb[0].mxu0
        %v1155 = vadd.f32 0.0, %v1154
        %v1156 = vpop.f32.mrb[0].mxu0
        %1157 = vdwg.mxu0
        %vm1158 = vcmp.eq.f32.partialorder %v374, 0.0
        %v1159 = vsel %vm1158, -1e+20, %v1128
        %v1160 = vsel %vm1158, -1e+20, %v1131
        %v1161 = vsel %vm1158, -1e+20, %v1136
        %v1162 = vsel %vm1158, -1e+20, %v1139
        %v1163 = vsel %vm1158, -1e+20, %v1144
        %v1164 = vsel %vm1158, -1e+20, %v1147
        %v1165 = vsel %vm1158, -1e+20, %v1152
        %v1166 = vsel %vm1158, -1e+20, %v1155
        %v1167 = vsel %vm668, %v1159, -inf
        %1168 = vmax.xlane.f32.xlu0 %v1167
        %v1169 = vpop.xlane.xlu0 %1168
        %v1170 = vsel %vm668, %v1160, -inf
        %1171 = vmax.xlane.f32.xlu0 %v1170
        %v1172 = vpop.xlane.xlu0 %1171
        %v1173 = vsel %vm668, %v1161, -inf
        %1174 = vmax.xlane.f32.xlu0 %v1173
        %v1175 = vpop.xlane.xlu0 %1174
        %v1176 = vsel %vm668, %v1162, -inf
        %1177 = vmax.xlane.f32.xlu0 %v1176
        %v1178 = vpop.xlane.xlu0 %1177
        %v1179 = vsel %vm668, %v1163, -inf
        %1180 = vmax.xlane.f32.xlu0 %v1179
        %v1181 = vpop.xlane.xlu0 %1180
        %v1182 = vsel %vm668, %v1164, -inf
        %1183 = vmax.xlane.f32.xlu0 %v1182
        %v1184 = vpop.xlane.xlu0 %1183
        %v1185 = vsel %vm668, %v1165, -inf
        %1186 = vmax.xlane.f32.xlu0 %v1185
        %v1187 = vpop.xlane.xlu0 %1186
        %v1188 = vsel %vm668, %v1166, -inf
        %1189 = vmax.xlane.f32.xlu0 %v1188
        %v1190 = vpop.xlane.xlu0 %1189
        %v1191 = vsub.f32 %v1159, %v1169
        %v1192 = vsub.f32 %v1160, %v1172
        %v1193 = vsub.f32 %v1161, %v1175
        %v1194 = vsub.f32 %v1162, %v1178
        %v1195 = vsub.f32 %v1163, %v1181
        %v1196 = vsub.f32 %v1164, %v1184
        %v1197 = vsub.f32 %v1165, %v1187
        %v1198 = vsub.f32 %v1166, %v1190
        %v1199 = vmul.f32 %v1191, 1.442695
        %v1200 = vpow.pop %v1199
        %v1201 = vmul.f32 %v1192, 1.442695
        %v1202 = vpow.pop %v1201
        %v1203 = vmul.f32 %v1193, 1.442695
        %v1204 = vpow.pop %v1203
        %v1205 = vmul.f32 %v1194, 1.442695
        %v1206 = vpow.pop %v1205
        %v1207 = vmul.f32 %v1195, 1.442695
        %v1208 = vpow.pop %v1207
        %v1209 = vmul.f32 %v1196, 1.442695
        %v1210 = vpow.pop %v1209
        %v1211 = vmul.f32 %v1197, 1.442695
        %v1212 = vpow.pop %v1211
        %v1213 = vmul.f32 %v1198, 1.442695
        %v1214 = vpow.pop %v1213
        %v1215 = vsel %vm668, %v1200, 0.0
        %1216 = vadd.xlane.f32.xlu0 %v1215
        %v1217 = vpop.xlane.xlu0 %1216
        %v1218 = vsel %vm668, %v1202, 0.0
        %1219 = vadd.xlane.f32.xlu0 %v1218
        %v1220 = vpop.xlane.xlu0 %1219
        %v1221 = vsel %vm668, %v1204, 0.0
        %1222 = vadd.xlane.f32.xlu0 %v1221
        %v1223 = vpop.xlane.xlu0 %1222
        %v1224 = vsel %vm668, %v1206, 0.0
        %1225 = vadd.xlane.f32.xlu0 %v1224
        %v1226 = vpop.xlane.xlu0 %1225
        %v1227 = vsel %vm668, %v1208, 0.0
        %1228 = vadd.xlane.f32.xlu0 %v1227
        %v1229 = vpop.xlane.xlu0 %1228
        %v1230 = vsel %vm668, %v1210, 0.0
        %1231 = vadd.xlane.f32.xlu0 %v1230
        %v1232 = vpop.xlane.xlu0 %1231
        %v1233 = vsel %vm668, %v1212, 0.0
        %1234 = vadd.xlane.f32.xlu0 %v1233
        %v1235 = vpop.xlane.xlu0 %1234
        %v1236 = vsel %vm668, %v1214, 0.0
        %1237 = vadd.xlane.f32.xlu0 %v1236
        %v1238 = vpop.xlane.xlu0 %1237
        %v1239 = vmax.f32 %v1217, 1e-30
        %v1240 = vmax.f32 %v1220, 1e-30
        %v1241 = vmax.f32 %v1223, 1e-30
        %v1242 = vmax.f32 %v1226, 1e-30
        %v1243 = vmax.f32 %v1229, 1e-30
        %v1244 = vmax.f32 %v1232, 1e-30
        %v1245 = vmax.f32 %v1235, 1e-30
        %v1246 = vmax.f32 %v1238, 1e-30
        %v1247 = vrcp.pop %v1239
        %v1248 = vrcp.pop %v1240
        %v1249 = vrcp.pop %v1241
        %v1250 = vrcp.pop %v1242
        %v1251 = vrcp.pop %v1243
        %v1252 = vrcp.pop %v1244
        %v1253 = vrcp.pop %v1245
        %v1254 = vrcp.pop %v1246
        %v1255 = vmul.f32 %v1200, %v1247
        %v1256 = vmul.f32 %v1202, %v1248
        %v1257 = vmul.f32 %v1204, %v1249
        %v1258 = vmul.f32 %v1206, %v1250
        %v1259 = vmul.f32 %v1208, %v1251
        %v1260 = vmul.f32 %v1210, %v1252
        %v1261 = vmul.f32 %v1212, %v1253
        %v1262 = vmul.f32 %v1214, %v1254
        %v1263 = vpack.c.bf16 %v1256, %v1255
        %v1264 = vpack.c.bf16 %v1258, %v1257
        %v1265 = vpack.c.bf16 %v1260, %v1259
        %v1266 = vpack.c.bf16 %v1262, %v1261
        %v1267 = vpack.c.bf16 %v372, %v372
        %v1269 = vsel %vm668, %v1263, 0
        %v1272 = vsel %vm668, %v1264, 0
        %v1275 = vsel %vm668, %v1265, 0
        %v1278 = vsel %vm668, %v1266, 0
        %v1281 = vsel %vm781, %v1267, 0
        %1283 = vmatprep.subr.bf16.mxu0 0
        %1284 = vmatpush1.bf16.msra.mxu0 %v1281
        %1285 = vmatprep.subr.bf16.mxu0 0
        %1286 = vmatpush1.bf16.msra.mxu0 0
        %1287 = vmatprep.subr.bf16.mxu0 0
        %1288 = vmatpush1.bf16.msra.mxu0 0
        %1289 = vmatprep.subr.bf16.mxu0 0
        %1290 = vmatpush1.bf16.msra.mxu0 0
        %1291 = vmatprep.subr.bf16.mxu0 0
        %1292 = vmatpush1.bf16.msra.mxu0 0
        %1293 = vmatprep.subr.bf16.mxu0 0
        %1294 = vmatpush1.bf16.msra.mxu0 0
        %1295 = vmatprep.subr.bf16.mxu0 0
        %1296 = vmatpush1.bf16.msra.mxu0 0
        %1297 = vmatprep.subr.bf16.mxu0 0
        %1298 = vmatpush1.bf16.msra.mxu0 0
        %1299 = vmatprep.subr.bf16.mxu0 0
        %1300 = vmatpush1.bf16.msra.mxu0 0
        %1301 = vmatprep.subr.bf16.mxu0 0
        %1302 = vmatpush1.bf16.msra.mxu0 0
        %1303 = vmatprep.subr.bf16.mxu0 0
        %1304 = vmatpush1.bf16.msra.mxu0 0
        %1305 = vmatprep.subr.bf16.mxu0 0
        %1306 = vmatpush1.bf16.msra.mxu0 0
        %1307 = vmatprep.subr.bf16.mxu0 0
        %1308 = vmatpush1.bf16.msra.mxu0 0
        %1309 = vmatprep.subr.bf16.mxu0 0
        %1310 = vmatpush1.bf16.msra.mxu0 0
        %1311 = vmatprep.subr.bf16.mxu0 0
        %1312 = vmatpush1.bf16.msra.mxu0 0
        %1313 = vmatprep.subr.bf16.mxu0 0
        %1314 = vmatpush1.bf16.msra.mxu0 0
        %1315 = vmatprep.mubr.bf16.mxu0 0
        %1316 = vmatmul.mubr.bf16.gmra.mrb[0].mxu0 %v1269
        %v1317 = vpop.f32.mrb[0].mxu0
        %v1318 = vadd.f32 0.0, %v1317
        %v1319 = vpop.f32.mrb[0].mxu0
        %v1320 = vpop.f32.mrb[0].mxu0
        %v1321 = vadd.f32 0.0, %v1320
        %v1322 = vpop.f32.mrb[0].mxu0
        %1323 = vmatprep.mubr.bf16.mxu0 0
        %1324 = vmatmul.mubr.bf16.gmra.mrb[0].mxu0 %v1272
        %v1325 = vpop.f32.mrb[0].mxu0
        %v1326 = vadd.f32 0.0, %v1325
        %v1327 = vpop.f32.mrb[0].mxu0
        %v1328 = vpop.f32.mrb[0].mxu0
        %v1329 = vadd.f32 0.0, %v1328
        %v1330 = vpop.f32.mrb[0].mxu0
        %1331 = vmatprep.mubr.bf16.mxu0 0
        %1332 = vmatmul.mubr.bf16.gmra.mrb[0].mxu0 %v1275
        %v1333 = vpop.f32.mrb[0].mxu0
        %v1334 = vadd.f32 0.0, %v1333
        %v1335 = vpop.f32.mrb[0].mxu0
        %v1336 = vpop.f32.mrb[0].mxu0
        %v1337 = vadd.f32 0.0, %v1336
        %v1338 = vpop.f32.mrb[0].mxu0
        %1339 = vmatprep.mubr.bf16.mxu0 0
        %1340 = vmatmul.mubr.bf16.gmra.mrb[0].mxu0 %v1278
        %v1341 = vpop.f32.mrb[0].mxu0
        %v1342 = vadd.f32 0.0, %v1341
        %v1343 = vpop.f32.mrb[0].mxu0
        %v1344 = vpop.f32.mrb[0].mxu0
        %v1345 = vadd.f32 0.0, %v1344
        %v1346 = vpop.f32.mrb[0].mxu0
        %1347 = vdwg.mxu0
        %v1348 = vmul.f32 %v1318, %v902
        %v1349 = vmul.f32 %v1321, %v906
        %v1350 = vmul.f32 %v1326, %v910
        %v1351 = vmul.f32 %v1329, %v914
        %v1352 = vmul.f32 %v1334, %v918
        %v1353 = vmul.f32 %v1337, %v922
        %v1354 = vmul.f32 %v1342, %v926
        %v1355 = vmul.f32 %v1345, %v930
        %v1356 = vsel %vm578, %v1348, 0.0
        %v1357 = vsel %vm578, %v1349, 0.0
        %v1358 = vadd.f32 %v1356, %v1357
        %v1359 = vsel %vm578, %v1350, 0.0
        %v1360 = vadd.f32 %v1358, %v1359
        %v1361 = vsel %vm578, %v1351, 0.0
        %v1362 = vadd.f32 %v1360, %v1361
        %v1363 = vsel %vm578, %v1352, 0.0
        %v1364 = vadd.f32 %v1362, %v1363
        %v1365 = vsel %vm578, %v1353, 0.0
        %v1366 = vadd.f32 %v1364, %v1365
        %v1367 = vsel %vm578, %v1354, 0.0
        %v1368 = vadd.f32 %v1366, %v1367
        %v1369 = vsel %vm578, %v1355, 0.0
        %v1370 = vadd.f32 %v1368, %v1369
        %v1371 = vpack.c.bf16 %v1370, %v1370
        %v1372 = vlaneseq
        %v1373 = vshrl.u32 %v1372, 7
        %v1374 = vsub.s32 3, %v1373
        %v1375 = vrot.slane %v403, %v1374
        %v1380 = vunpack.c.l.b16 %v379
        %v1381 = vunpack.c.l.b16 %v380
        %v1382 = vunpack.c.l.b16 %v381
        %v1383 = vunpack.c.l.b16 %v382
        %v1384 = vpack.c.b16 %v1381, %v1380
        %v1385 = vpack.c.b16 %v1383, %v1382
        %v1389 = vsel %vm578, %v1371, 0
        %1391 = vmatprep.subr.bf16.mxu0 0
        %1392 = vmatpush1.bf16.msra.mxu0 %v1384
        %1393 = vmatprep.subr.bf16.mxu0 0
        %1394 = vmatpush1.bf16.msra.mxu0 %v1385
        %1395 = vmatprep.subr.bf16.mxu0 0
        %1396 = vmatpush1.bf16.msra.mxu0 0
        %1397 = vmatprep.subr.bf16.mxu0 0
        %1398 = vmatpush1.bf16.msra.mxu0 0
        %1399 = vmatprep.subr.bf16.mxu0 0
        %1400 = vmatpush1.bf16.msra.mxu0 0
        %1401 = vmatprep.subr.bf16.mxu0 0
        %1402 = vmatpush1.bf16.msra.mxu0 0
        %1403 = vmatprep.subr.bf16.mxu0 0
        %1404 = vmatpush1.bf16.msra.mxu0 0
        %1405 = vmatprep.subr.bf16.mxu0 0
        %1406 = vmatpush1.bf16.msra.mxu0 0
        %1407 = vmatprep.subr.bf16.mxu0 0
        %1408 = vmatpush1.bf16.msra.mxu0 0
        %1409 = vmatprep.subr.bf16.mxu0 0
        %1410 = vmatpush1.bf16.msra.mxu0 0
        %1411 = vmatprep.subr.bf16.mxu0 0
        %1412 = vmatpush1.bf16.msra.mxu0 0
        %1413 = vmatprep.subr.bf16.mxu0 0
        %1414 = vmatpush1.bf16.msra.mxu0 0
        %1415 = vmatprep.subr.bf16.mxu0 0
        %1416 = vmatpush1.bf16.msra.mxu0 0
        %1417 = vmatprep.subr.bf16.mxu0 0
        %1418 = vmatpush1.bf16.msra.mxu0 0
        %1419 = vmatprep.subr.bf16.mxu0 0
        %1420 = vmatpush1.bf16.msra.mxu0 0
        %1421 = vmatprep.subr.bf16.mxu0 0
        %1422 = vmatpush1.bf16.msra.mxu0 0
        %1423 = vmatprep.mubr.bf16.mxu0 0
        %1424 = vmatmul.mubr.bf16.gmra.mrb[0].mxu0 %v1389
        %v1425 = vpop.f32.mrb[0].mxu0
        %v1426 = vadd.f32 %v1375, %v1425
        %v1427 = vpop.f32.mrb[0].mxu0
        %v1428 = vpop.f32.mrb[0].mxu0
        %v1429 = vpop.f32.mrb[0].mxu0
        %1430 = vdwg.mxu0
        %v1431 = vadd.f32 %v1426, %v1046
        %v1432 = vsel %vm578, %v1431, 0.0
        %1433 = vadd.xlane.f32.xlu0 %v1432
        %v1434 = vpop.xlane.xlu0 %1433
        %v1435 = vmul.f32 %v1434, %v1026
        %v1436 = vsub.f32 %v1431, %v1435
        %v1437 = vmul.f32 %v1436, %v1436
        %v1438 = vsel %vm578, %v1437, 0.0
        %1439 = vadd.xlane.f32.xlu0 %v1438
        %v1440 = vpop.xlane.xlu0 %1439
        %v1441 = vmul.f32 %v1440, %v1026
        %v1442 = vadd.f32 %v1441, 1e-05
        %v1443 = vrsqrt.pop %v1442
        %v1444 = vmul.f32 %v1436, %v1443
        %v1445 = vlaneseq
        %v1446 = vshrl.u32 %v1445, 7
        %v1447 = vsub.s32 4, %v1446
        %v1448 = vrot.slane %v403, %v1447
        %v1449 = vmul.f32 %v1444, %v1448
        %v1450 = vlaneseq
        %v1451 = vshrl.u32 %v1450, 7
        %v1452 = vsub.s32 5, %v1451
        %v1453 = vrot.slane %v403, %v1452
        %v1454 = vadd.f32 %v1449, %v1453
        %v1455 = vsel %vm578, %v1454, 0.0
        %1456 = vadd.xlane.f32.xlu0 %v1455
        %v1457 = vpop.xlane.xlu0 %1456
        %v1458 = vmul.f32 %v1457, %v1026
        %v1459 = vsub.f32 %v1454, %v1458
        %v1460 = vmul.f32 %v1459, %v1459
        %v1461 = vsel %vm578, %v1460, 0.0
        %1462 = vadd.xlane.f32.xlu0 %v1461
        %v1463 = vpop.xlane.xlu0 %1462
        %v1464 = vmul.f32 %v1463, %v1026
        %v1465 = vadd.f32 %v1464, 1e-05
        %v1466 = vrsqrt.pop %v1465
        %v1467 = vmul.f32 %v1459, %v1466
        %v1468 = vmul.f32 %v1467, %v1448
        %v1469 = vadd.f32 %v1468, %v1453
        %v1470 = vpack.c.bf16 %v1469, %v1469
        %v1471 = vlaneseq
        %v1472 = vshrl.u32 %v1471, 7
        %v1473 = vsub.s32 1, %v1472
        %v1474 = vrot.slane %v404, %v1473
        %v1479 = vunpack.c.l.b16 %v399
        %v1480 = vunpack.c.l.b16 %v400
        %v1481 = vunpack.c.l.b16 %v401
        %v1482 = vunpack.c.l.b16 %v402
        %v1483 = vpack.c.b16 %v1480, %v1479
        %v1484 = vpack.c.b16 %v1482, %v1481
        %v1488 = vsel %vm578, %v1470, 0
        %1490 = vmatprep.subr.bf16.mxu0 0
        %1491 = vmatpush1.bf16.msra.mxu0 %v1483
        %1492 = vmatprep.subr.bf16.mxu0 0
        %1493 = vmatpush1.bf16.msra.mxu0 %v1484
        %1494 = vmatprep.subr.bf16.mxu0 0
        %1495 = vmatpush1.bf16.msra.mxu0 0
        %1496 = vmatprep.subr.bf16.mxu0 0
        %1497 = vmatpush1.bf16.msra.mxu0 0
        %1498 = vmatprep.subr.bf16.mxu0 0
        %1499 = vmatpush1.bf16.msra.mxu0 0
        %1500 = vmatprep.subr.bf16.mxu0 0
        %1501 = vmatpush1.bf16.msra.mxu0 0
        %1502 = vmatprep.subr.bf16.mxu0 0
        %1503 = vmatpush1.bf16.msra.mxu0 0
        %1504 = vmatprep.subr.bf16.mxu0 0
        %1505 = vmatpush1.bf16.msra.mxu0 0
        %1506 = vmatprep.subr.bf16.mxu0 0
        %1507 = vmatpush1.bf16.msra.mxu0 0
        %1508 = vmatprep.subr.bf16.mxu0 0
        %1509 = vmatpush1.bf16.msra.mxu0 0
        %1510 = vmatprep.subr.bf16.mxu0 0
        %1511 = vmatpush1.bf16.msra.mxu0 0
        %1512 = vmatprep.subr.bf16.mxu0 0
        %1513 = vmatpush1.bf16.msra.mxu0 0
        %1514 = vmatprep.subr.bf16.mxu0 0
        %1515 = vmatpush1.bf16.msra.mxu0 0
        %1516 = vmatprep.subr.bf16.mxu0 0
        %1517 = vmatpush1.bf16.msra.mxu0 0
        %1518 = vmatprep.subr.bf16.mxu0 0
        %1519 = vmatpush1.bf16.msra.mxu0 0
        %1520 = vmatprep.subr.bf16.mxu0 0
        %1521 = vmatpush1.bf16.msra.mxu0 0
        %1522 = vmatprep.mubr.bf16.mxu0 0
        %1523 = vmatmul.mubr.bf16.gmra.mrb[0].mxu0 %v1488
        %v1524 = vpop.f32.mrb[0].mxu0
        %v1525 = vadd.f32 %v1474, %v1524
        %v1526 = vpop.f32.mrb[0].mxu0
        %v1527 = vpop.f32.mrb[0].mxu0
        %v1528 = vpop.f32.mrb[0].mxu0
        %1529 = vdwg.mxu0
        %v1530 = vmax.f32 %v1525, 0.0
        %v1531 = vpack.c.bf16 %v1530, %v1530
        %v1532 = vlaneseq
        %v1533 = vshrl.u32 %v1532, 7
        %v1534 = vsub.s32 6, %v1533
        %v1535 = vrot.slane %v403, %v1534
        %v1552 = vunpack.c.l.b16 %v383
        %v1553 = vunpack.c.l.b16 %v384
        %v1554 = vunpack.c.l.b16 %v385
        %v1555 = vunpack.c.l.b16 %v386
        %v1556 = vunpack.c.l.b16 %v387
        %v1557 = vunpack.c.l.b16 %v388
        %v1558 = vunpack.c.l.b16 %v389
        %v1559 = vunpack.c.l.b16 %v390
        %v1560 = vunpack.c.l.b16 %v391
        %v1561 = vunpack.c.l.b16 %v392
        %v1562 = vunpack.c.l.b16 %v393
        %v1563 = vunpack.c.l.b16 %v394
        %v1564 = vunpack.c.l.b16 %v395
        %v1565 = vunpack.c.l.b16 %v396
        %v1566 = vunpack.c.l.b16 %v397
        %v1567 = vunpack.c.l.b16 %v398
        %v1568 = vpack.c.b16 %v1553, %v1552
        %v1569 = vpack.c.b16 %v1555, %v1554
        %v1570 = vpack.c.b16 %v1557, %v1556
        %v1571 = vpack.c.b16 %v1559, %v1558
        %v1572 = vpack.c.b16 %v1561, %v1560
        %v1573 = vpack.c.b16 %v1563, %v1562
        %v1574 = vpack.c.b16 %v1565, %v1564
        %v1575 = vpack.c.b16 %v1567, %v1566
        %1584 = vmatprep.subr.bf16.mxu0 0
        %1585 = vmatpush1.bf16.msra.mxu0 %v1568
        %1586 = vmatprep.subr.bf16.mxu0 0
        %1587 = vmatpush1.bf16.msra.mxu0 %v1569
        %1588 = vmatprep.subr.bf16.mxu0 0
        %1589 = vmatpush1.bf16.msra.mxu0 %v1570
        %1590 = vmatprep.subr.bf16.mxu0 0
        %1591 = vmatpush1.bf16.msra.mxu0 %v1571
        %1592 = vmatprep.subr.bf16.mxu0 0
        %1593 = vmatpush1.bf16.msra.mxu0 %v1572
        %1594 = vmatprep.subr.bf16.mxu0 0
        %1595 = vmatpush1.bf16.msra.mxu0 %v1573
        %1596 = vmatprep.subr.bf16.mxu0 0
        %1597 = vmatpush1.bf16.msra.mxu0 %v1574
        %1598 = vmatprep.subr.bf16.mxu0 0
        %1599 = vmatpush1.bf16.msra.mxu0 %v1575
        %1600 = vmatprep.subr.bf16.mxu0 0
        %1601 = vmatpush1.bf16.msra.mxu0 0
        %1602 = vmatprep.subr.bf16.mxu0 0
        %1603 = vmatpush1.bf16.msra.mxu0 0
        %1604 = vmatprep.subr.bf16.mxu0 0
        %1605 = vmatpush1.bf16.msra.mxu0 0
        %1606 = vmatprep.subr.bf16.mxu0 0
        %1607 = vmatpush1.bf16.msra.mxu0 0
        %1608 = vmatprep.subr.bf16.mxu0 0
        %1609 = vmatpush1.bf16.msra.mxu0 0
        %1610 = vmatprep.subr.bf16.mxu0 0
        %1611 = vmatpush1.bf16.msra.mxu0 0
        %1612 = vmatprep.subr.bf16.mxu0 0
        %1613 = vmatpush1.bf16.msra.mxu0 0
        %1614 = vmatprep.subr.bf16.mxu0 0
        %1615 = vmatpush1.bf16.msra.mxu0 0
        %1616 = vmatprep.mubr.bf16.mxu0 0
        %1617 = vmatmul.mubr.bf16.gmra.mrb[0].mxu0 %v1531
        %v1618 = vpop.f32.mrb[0].mxu0
        %v1619 = vadd.f32 %v1535, %v1618
        %v1620 = vpop.f32.mrb[0].mxu0
        %v1621 = vpop.f32.mrb[0].mxu0
        %v1622 = vpop.f32.mrb[0].mxu0
        %1623 = vdwg.mxu0
        %v1624 = vadd.f32 %v1619, %v1469
        %v1625 = vsel %vm578, %v1624, 0.0
        %1626 = vadd.xlane.f32.xlu0 %v1625
        %v1627 = vpop.xlane.xlu0 %1626
        %v1628 = vmul.f32 %v1627, %v1026
        %v1629 = vsub.f32 %v1624, %v1628
        %v1630 = vmul.f32 %v1629, %v1629
        %v1631 = vsel %vm578, %v1630, 0.0
        %1632 = vadd.xlane.f32.xlu0 %v1631
        %v1633 = vpop.xlane.xlu0 %1632
        %v1634 = vmul.f32 %v1633, %v1026
        %v1635 = vadd.f32 %v1634, 1e-05
        %v1636 = vrsqrt.pop %v1635
        %v1637 = vmul.f32 %v1629, %v1636
        %v1638 = vlaneseq
        %v1639 = vshrl.u32 %v1638, 7
        %v1640 = vsub.s32 7, %v1639
        %v1641 = vrot.slane %v403, %v1640
        %v1642 = vmul.f32 %v1637, %v1641
        %v1643 = vlaneseq
        %v1644 = vshrl.u32 %v1643, 7
        %v1645 = vsub.s32 0, %v1644
        %v1646 = vrot.slane %v404, %v1645
        %v1647 = vadd.f32 %v1642, %v1646
        %1648 = vst.msk [vmem:[%s348] sm:$0xff] %vm578, %v1647
        %s1649 = sand.u32 %s223, 1
        %s1650 = scalar_lea.sflag [#allocation3], %s1649
        %s1651 = sand.u32 %s223, 1
        %s1652 = smul.addr %s1651, 8
        %s1653 = scalar_lea.vmem [#allocation2], %s1652
        // Predicated region
        $region53: #{tpu_custom_call.1} parent=51 // pred_check
          %p1654 = pneg %p233
        $region54: #{tpu_custom_call.1} parent=51 // pred_check_branch
          %1656 = sbr.rel (%p1654) target = $region56
        $region55: #{tpu_custom_call.1} parent=51 // pred_region
          %s1658 = ssub.s32 128, 128
          %1659 = vsyncadd %s1650, %s1658
          %s1660 = smul.addr %s22, 128
          %s1661 = scalar_lea.hbm %s8, %s1660
          %s1663 = sshll.u32 %s1653, 4
          %s1664 = int_to_ptr.vmem [resolvable:$true] %s1663
          %1666 = dma.vmem_to_hbm [thread:$0]  %s1664, 128, %s1661, %s1650
        $region56: #{tpu_custom_call.1} parent=51 // pred_fallthru
          _
      $region52: #{tpu_custom_call.1} parent=5 // pred_fallthru
        _
      %p1667 = scmp.le.s32.totalorder 2, %s17
      // Predicated region
      $region57: #{tpu_custom_call.1} parent=5 // pred_check
        %p1668 = pneg %p1667
      $region58: #{tpu_custom_call.1} parent=5 // pred_check_branch
        %1670 = sbr.rel (%p1668) target = $region60
      $region59: #{tpu_custom_call.1} parent=5 // pred_region
        %s1671 = ssub.s32 %s17, 2
        // Predicated region
        $region61: #{tpu_custom_call.1} parent=59 // pred_check
          %p1672 = pneg %p239
        $region62: #{tpu_custom_call.1} parent=59 // pred_check_branch
          %1674 = sbr.rel (%p1672) target = $region64
        $region63: #{tpu_custom_call.1} parent=59 // pred_region
          %s1675 = sand.u32 %s224, 1
          %s1676 = scalar_lea.sflag [#allocation3], %s1675
          %s1677 = sand.u32 %s224, 1
          %s1678 = smul.addr %s1677, 8
          %s1679 = scalar_lea.vmem [#allocation2], %s1678
          %1680 = dma.done %s1676, 128
        $region64: #{tpu_custom_call.1} parent=59 // pred_fallthru
          _
      $region60: #{tpu_custom_call.1} parent=5 // pred_fallthru
        _
    $region6: #{tpu_custom_call.1} parent=1 // loop_footer
      %s21 = sadd.s32 1, %s17
    $region7: #{tpu_custom_call.1} parent=1 // loop_footer_branch
      %16 = sbr.rel target = $region3
    $region8: #{tpu_custom_call.1} parent=1 // loop_exit
      _
    %1681 = vsyncpa [#allocation3], 1
    %s1682 = scalar_lea.sflag [#allocation3], 1
    %1683 = vsyncpa %s1682, 1

</llo_original>
